<compile_context>
chip_gen: v7x
topology: tpu7x:2x2x1
jax: 0.10.0
libtpu: 0.0.40
codegen_flags: <defaults>
</compile_context>

<pallas_src>
import functools

import jax
import jax.numpy as jnp
from jax.experimental import pallas as pl
from jax.experimental.pallas import tpu as pltpu

# Synthetic sizes for the undefined env constants in the original file.
S_DIM = 32          # S_dim
HIDDEN = 2048       # fixed by the module
N_ACTION = 8        # env.action_space.actions_index_number
NEG_SLOPE = 0.01    # nn.LeakyReLU default negative_slope


def _pick_act_dtype():
    """Elementwise dtype for the hidden activation: bf16 where the VPU has
    native bf16 (v6e / v7x), f32 elsewhere (v5e and older have no bf16 VALU)."""
    try:
        kind = jax.devices()[0].device_kind.lower()
    except Exception:
        return jnp.float32
    return jnp.bfloat16 if ("v6" in kind or "v7" in kind) else jnp.float32


ACT_DTYPE = _pick_act_dtype()


def classifier_kernel(x_ref, w1_ref, b1_ref, w2_ref, b2_ref, o_ref, *, act_dtype):
    # Layer 1: (TB, S) @ (S, H) on the MXU, f32 accumulation.
    x = x_ref[...].astype(jnp.bfloat16)            # no-op if x is already bf16
    h = jnp.dot(x, w1_ref[...], preferred_element_type=jnp.float32)
    # Bias + LeakyReLU on the big (TB, H) intermediate in act_dtype (VPU).
    h = h.astype(act_dtype) + b1_ref[...].astype(act_dtype)
    h = jnp.maximum(h, NEG_SLOPE * h)              # LeakyReLU (slope in [0, 1])
    # Layer 2: (TB, H) @ (H, NA); NA is narrow -- the MXU masks unused columns.
    o = jnp.dot(h.astype(jnp.bfloat16), w2_ref[...],
                preferred_element_type=jnp.float32)
    o_ref[...] = o + b2_ref[...]                   # (TB, NA) f32 store


@functools.partial(jax.jit, static_argnames=("tb",))
def classifier_forward(x, w1, b1, w2, b2, *, tb=512):
    """x: (B, S_DIM) f32 (or bf16); w1: (S_DIM, HIDDEN) bf16; b1: (1, HIDDEN) f32;
    w2: (HIDDEN, N_ACTION) bf16; b2: (1, N_ACTION) f32.  Returns (B, N_ACTION) f32."""
    B, S = x.shape
    H = w1.shape[1]
    NA = w2.shape[1]

    # Batch tile:
    #   * tiny B: one block exactly equal to the batch (no masking at all),
    #   * B <= tb: split into two tiles so both v7x TensorCores get work,
    #   * large B: fixed tb (per-step VMEM ~8-10 MiB, fits every chip's VMEM).
    if B <= 8:
        TB = B
    elif B <= tb:
        TB = pl.cdiv(pl.cdiv(B, 2), 8) * 8
    else:
        TB = tb
    grid = (pl.cdiv(B, TB),)
    # Note: pipeline_mode=pl.Buffered(3) on x/out is a candidate sweep for very
    # long grids (latency hiding); kept at the default depth here.

    kernel = functools.partial(classifier_kernel, act_dtype=ACT_DTYPE)
    return pl.pallas_call(
        kernel,
        out_shape=jax.ShapeDtypeStruct((B, NA), jnp.float32),
        grid=grid,
        in_specs=[
            pl.BlockSpec((TB, S), lambda i: (i, 0)),   # x: batch-tiled, double-buffered
            pl.BlockSpec((S, H), lambda i: (0, 0)),    # W1: VMEM-resident (DMA'd once)
            pl.BlockSpec((1, H), lambda i: (0, 0)),    # b1: resident
            pl.BlockSpec((H, NA), lambda i: (0, 0)),   # W2: resident, true (unpadded) width
            pl.BlockSpec((1, NA), lambda i: (0, 0)),   # b2: resident
        ],
        out_specs=pl.BlockSpec((TB, NA), lambda i: (i, 0)),
        compiler_params=pltpu.CompilerParams(
            dimension_semantics=("parallel",),         # shard batch across v7x's 2 TCs
            vmem_limit_bytes=32 * 1024 * 1024,         # v5e's 16 MiB default is tight at tb>=1024
        ),
    )(x, w1, b1, w2, b2)


def init_params(key):
    """PyTorch nn.Linear-style U(-1/sqrt(fan_in), +1/sqrt(fan_in)) init, f32."""
    k1, k2, k3, k4 = jax.random.split(key, 4)
    bound1 = 1.0 / jnp.sqrt(S_DIM)
    bound2 = 1.0 / jnp.sqrt(HIDDEN)
    w1 = jax.random.uniform(k1, (S_DIM, HIDDEN), jnp.float32, -bound1, bound1)
    b1 = jax.random.uniform(k2, (1, HIDDEN), jnp.float32, -bound1, bound1)
    w2 = jax.random.uniform(k3, (HIDDEN, N_ACTION), jnp.float32, -bound2, bound2)
    b2 = jax.random.uniform(k4, (1, N_ACTION), jnp.float32, -bound2, bound2)
    return w1, b1, w2, b2


def to_kernel_params(w1, b1, w2, b2):
    """Kernel layout: bf16 matmul weights (f32 MXU accumulation), f32 biases."""
    return w1.astype(jnp.bfloat16), b1, w2.astype(jnp.bfloat16), b2


def _reference_same_recipe(x, w1b, b1, w2b, b2, act_dtype):
    """Pure-JAX reference using the identical bf16-weight / f32-accumulate recipe."""
    h = jnp.dot(x.astype(jnp.bfloat16), w1b, preferred_element_type=jnp.float32)
    h = h.astype(act_dtype) + b1.astype(act_dtype)
    h = jnp.maximum(h, NEG_SLOPE * h)
    return jnp.dot(h.astype(jnp.bfloat16), w2b,
                   preferred_element_type=jnp.float32) + b2


def _reference_f32(x, w1, b1, w2, b2):
    """Full-f32 reference matching the PyTorch module's numerics."""
    h = x @ w1 + b1
    h = jnp.where(h >= 0, h, NEG_SLOPE * h)
    return h @ w2 + b2


if __name__ == "__main__":
    key = jax.random.PRNGKey(0)
    kx, kx2, kp = jax.random.split(key, 3)

    w1f, b1f, w2f, b2f = init_params(kp)
    w1, b1, w2, b2 = to_kernel_params(w1f, b1f, w2f, b2f)

    # Small batch: single block exactly equal to the batch (no masking).
    B = 2
    x = jax.random.normal(kx, (B, S_DIM), jnp.float32)
    out = jax.block_until_ready(classifier_forward(x, w1, b1, w2, b2))
    assert out.shape == (B, N_ACTION)
    ref = _reference_same_recipe(x, w1, b1, w2, b2, ACT_DTYPE)
    assert jnp.allclose(out, ref, atol=2e-3, rtol=2e-3)
    # Documented deviation from PyTorch's f32 path (bf16 weights/activations,
    # f32 accumulation): loose absolute check against the full-f32 reference.
    assert jnp.allclose(out, _reference_f32(x, w1f, b1f, w2f, b2f), atol=1e-1)

    # Multi-tile path: 2 grid steps + ragged last block, no wrapper padding.
    B2 = 300
    x2 = jax.random.normal(kx2, (B2, S_DIM), jnp.float32)
    out2 = jax.block_until_ready(classifier_forward(x2, w1, b1, w2, b2))
    assert out2.shape == (B2, N_ACTION)
    ref2 = _reference_same_recipe(x2, w1, b1, w2, b2, ACT_DTYPE)
    assert jnp.allclose(out2, ref2, atol=2e-3, rtol=2e-3)

    print("KERNEL_OK")
</pallas_src>

<mosaic_0001>
module attributes {stable_mosaic.version = 11 : i64} {
  func.func @classifier_kernel(%arg0: i32, %arg1: memref<2x32xf32, #tpu.memory_space<vmem>>, %arg2: memref<32x2048xbf16, #tpu.memory_space<vmem>>, %arg3: memref<1x2048xf32, #tpu.memory_space<vmem>>, %arg4: memref<2048x8xbf16, #tpu.memory_space<vmem>>, %arg5: memref<1x8xf32, #tpu.memory_space<vmem>>, %arg6: memref<2x8xf32, #tpu.memory_space<vmem>>) attributes {dimension_semantics = [#tpu.dimension_semantics<parallel>], iteration_bounds = array<i64: 1>, scalar_prefetch = 0 : i64, scratch_operands = 0 : i64, tpu.core_type = #tpu.core_type<tc>, window_params = [{transform_indices = @transform_0, window_bounds = array<i64: 2, 32>}, {pipeline_mode = #tpu.pipeline_mode<synchronous>, transform_indices = @transform_1, window_bounds = array<i64: 32, 2048>}, {pipeline_mode = #tpu.pipeline_mode<synchronous>, transform_indices = @transform_2, window_bounds = array<i64: 1, 2048>}, {pipeline_mode = #tpu.pipeline_mode<synchronous>, transform_indices = @transform_3, window_bounds = array<i64: 2048, 8>}, {pipeline_mode = #tpu.pipeline_mode<synchronous>, transform_indices = @transform_4, window_bounds = array<i64: 1, 8>}, {transform_indices = @transform_5, window_bounds = array<i64: 2, 8>}]} {
    %c0 = arith.constant 0 : index
    %c0_0 = arith.constant 0 : index
    %0 = vector.load %arg1[%c0, %c0_0] : memref<2x32xf32, #tpu.memory_space<vmem>>, vector<2x32xf32>
    %1 = arith.truncf %0 : vector<2x32xf32> to vector<2x32xbf16>
    %c0_1 = arith.constant 0 : index
    %c0_2 = arith.constant 0 : index
    %2 = vector.load %arg2[%c0_1, %c0_2] : memref<32x2048xbf16, #tpu.memory_space<vmem>>, vector<32x2048xbf16>
    %cst = arith.constant dense<0.000000e+00> : vector<2x2048xf32>
    %3 = tpu.matmul %1, %2, %cst {dimension_numbers = #tpu.dot_dimension_numbers<[1], [0], [0], [1], [0, 0, 1, 1], [], []>} : vector<2x32xbf16>, vector<32x2048xbf16>, vector<2x2048xf32> -> vector<2x2048xf32>
    %c0_3 = arith.constant 0 : index
    %c0_4 = arith.constant 0 : index
    %4 = vector.load %arg3[%c0_3, %c0_4] : memref<1x2048xf32, #tpu.memory_space<vmem>>, vector<1x2048xf32>
    %5 = vector.broadcast %4 : vector<1x2048xf32> to vector<2x2048xf32>
    %6 = arith.addf %3, %5 : vector<2x2048xf32>
    %cst_5 = arith.constant 0.00999999977 : f32
    %7 = vector.broadcast %cst_5 : f32 to vector<2x2048xf32>
    %8 = arith.mulf %7, %6 : vector<2x2048xf32>
    %9 = arith.maximumf %6, %8 : vector<2x2048xf32>
    %10 = arith.truncf %9 : vector<2x2048xf32> to vector<2x2048xbf16>
    %c0_6 = arith.constant 0 : index
    %c0_7 = arith.constant 0 : index
    %11 = vector.load %arg4[%c0_6, %c0_7] : memref<2048x8xbf16, #tpu.memory_space<vmem>>, vector<2048x8xbf16>
    %cst_8 = arith.constant dense<0.000000e+00> : vector<2x8xf32>
    %12 = tpu.matmul %10, %11, %cst_8 {dimension_numbers = #tpu.dot_dimension_numbers<[1], [0], [0], [1], [0, 0, 1, 1], [], []>} : vector<2x2048xbf16>, vector<2048x8xbf16>, vector<2x8xf32> -> vector<2x8xf32>
    %c0_9 = arith.constant 0 : index
    %c0_10 = arith.constant 0 : index
    %13 = vector.load %arg5[%c0_9, %c0_10] : memref<1x8xf32, #tpu.memory_space<vmem>>, vector<1x8xf32>
    %14 = vector.broadcast %13 : vector<1x8xf32> to vector<2x8xf32>
    %15 = arith.addf %12, %14 : vector<2x8xf32>
    %c0_11 = arith.constant 0 : index
    %c0_12 = arith.constant 0 : index
    %16 = vector.load %arg6[%c0_11, %c0_12] : memref<2x8xf32, #tpu.memory_space<vmem>>, vector<2x8xf32>
    tpu.vector_store %arg6[%c0_11, %c0_12], %15 {strides = array<i32>} : memref<2x8xf32, #tpu.memory_space<vmem>>, vector<2x8xf32>,
    return
  }
  func.func @transform_0(%arg0: i32) -> (i32, i32) {
    %c0_i32 = arith.constant 0 : i32
    %c0_i32_0 = arith.constant 0 : i32
    return %arg0, %c0_i32 : i32, i32
  }
  func.func @transform_1(%arg0: i32) -> (i32, i32) {
    %c0_i32 = arith.constant 0 : i32
    %c0_i32_0 = arith.constant 0 : i32
    %c0_i32_1 = arith.constant 0 : i32
    return %c0_i32, %c0_i32_0 : i32, i32
  }
  func.func @transform_2(%arg0: i32) -> (i32, i32) {
    %c0_i32 = arith.constant 0 : i32
    %c0_i32_0 = arith.constant 0 : i32
    %c0_i32_1 = arith.constant 0 : i32
    return %c0_i32, %c0_i32_0 : i32, i32
  }
  func.func @transform_3(%arg0: i32) -> (i32, i32) {
    %c0_i32 = arith.constant 0 : i32
    %c0_i32_0 = arith.constant 0 : i32
    %c0_i32_1 = arith.constant 0 : i32
    return %c0_i32, %c0_i32_0 : i32, i32
  }
  func.func @transform_4(%arg0: i32) -> (i32, i32) {
    %c0_i32 = arith.constant 0 : i32
    %c0_i32_0 = arith.constant 0 : i32
    %c0_i32_1 = arith.constant 0 : i32
    return %c0_i32, %c0_i32_0 : i32, i32
  }
  func.func @transform_5(%arg0: i32) -> (i32, i32) {
    %c0_i32 = arith.constant 0 : i32
    %c0_i32_0 = arith.constant 0 : i32
    return %arg0, %c0_i32 : i32, i32
  }
}

</mosaic_0001>

<llo_original>
// kernel: classifier_forward.1
$region0: #{classifier_forward.1}
  #allocation0 [shape = 'u32[]', space=smem, size = 0x4, offset = 0x4, fixed_abs, tag = 'smem constant byte address 0x4 - core index']
  #allocation1 [shape = 'u32[144,128]{1,0:T(1,128)}', space=vmem, size = 0x12000, scoped, tag = 'internal scratch']
  %s0 = inlined_call_operand.vmem [shape: f32[2,32], index: 0, kind: input, shape index: {}]
  %s1 = inlined_call_operand.vmem [shape: bf16[32,2048], index: 1, kind: input, shape index: {}]
  %s2 = inlined_call_operand.vmem [shape: f32[1,2048], index: 2, kind: input, shape index: {}]
  %s3 = inlined_call_operand.vmem [shape: bf16[2048,8], index: 3, kind: input, shape index: {}]
  %s4 = inlined_call_operand.vmem [shape: f32[1,8], index: 4, kind: input, shape index: {}]
  %s5 = inlined_call_operand.hbm [shape: f32[2,8], index: 5, kind: output, shape index: {}]
  %s6 = sld [smem:[#allocation0]]
  $region30: #{classifier_forward.1} parent=0
    _
  %s8 = ssub.s32 1, %s6
  %s9 = scalar_select 0, %s8, %s6
  $region1: #{classifier_forward.1} parent=0
    #allocation2 [shape = 'u8[1024]{0}', space=vmem, size = 0x400, scoped, tag = 'output window, operand 0, single buffered']
    #allocation3 [shape = 's32[1]{0}', space=sflag, size = 0x4, scoped, tag = 'scoped memory for classifier_forward.1']
    %10 = vsyncpa [#allocation3], 0
    // Predicated region
    $region2: #{classifier_forward.1} parent=1 // pred_check
      _
    $region3: #{classifier_forward.1} parent=1 // pred_check_branch
      %12 = sbr.rel (0) target = $region5
    $region4: #{classifier_forward.1} parent=1 // pred_region
      _
    $region5: #{classifier_forward.1} parent=1 // pred_fallthru
      _
    // Predicated region
    $region6: #{classifier_forward.1} parent=1 // pred_check
      _
    $region7: #{classifier_forward.1} parent=1 // pred_check_branch
      %14 = sbr.rel (0) target = $region9
    $region8: #{classifier_forward.1} parent=1 // pred_region
      _
    $region9: #{classifier_forward.1} parent=1 // pred_fallthru
      _
    // Predicated region
    $region10: #{classifier_forward.1} parent=1 // pred_check
      _
    $region11: #{classifier_forward.1} parent=1 // pred_check_branch
      %16 = sbr.rel (0) target = $region13
    $region12: #{classifier_forward.1} parent=1 // pred_region
      _
    $region13: #{classifier_forward.1} parent=1 // pred_fallthru
      _
    // Predicated region
    $region14: #{classifier_forward.1} parent=1 // pred_check
      _
    $region15: #{classifier_forward.1} parent=1 // pred_check_branch
      %18 = sbr.rel (0) target = $region17
    $region16: #{classifier_forward.1} parent=1 // pred_region
      _
    $region17: #{classifier_forward.1} parent=1 // pred_fallthru
      _
    // Predicated region
    $region18: #{classifier_forward.1} parent=1 // pred_check
      _
    $region19: #{classifier_forward.1} parent=1 // pred_check_branch
      %20 = sbr.rel (0) target = $region21
    $region20: #{classifier_forward.1} parent=1 // pred_region
      _
    $region21: #{classifier_forward.1} parent=1 // pred_fallthru
      _
    %v22 = vld [vmem:[%s0] sm:$0x3]
    %v23 = vpack.c.bf16 %v22, %v22
    %v24 = vld [vmem:[%s1] sm:$0xff]
    %v25 = vld [vmem:[%s1 + $0x8] sm:$0xff]
    %v26 = vld [vmem:[%s1 + $0x10] sm:$0xff]
    %v27 = vld [vmem:[%s1 + $0x18] sm:$0xff]
    %v28 = vld [vmem:[%s1 + $0x20] sm:$0xff]
    %v29 = vld [vmem:[%s1 + $0x28] sm:$0xff]
    %v30 = vld [vmem:[%s1 + $0x30] sm:$0xff]
    %v31 = vld [vmem:[%s1 + $0x38] sm:$0xff]
    %v32 = vld [vmem:[%s1 + $0x40] sm:$0xff]
    %v33 = vld [vmem:[%s1 + $0x48] sm:$0xff]
    %v34 = vld [vmem:[%s1 + $0x50] sm:$0xff]
    %v35 = vld [vmem:[%s1 + $0x58] sm:$0xff]
    %v36 = vld [vmem:[%s1 + $0x60] sm:$0xff]
    %v37 = vld [vmem:[%s1 + $0x68] sm:$0xff]
    %v38 = vld [vmem:[%s1 + $0x70] sm:$0xff]
    %v39 = vld [vmem:[%s1 + $0x78] sm:$0xff]
    %v40 = vld [vmem:[%s1 + $0x80] sm:$0xff]
    %v41 = vld [vmem:[%s1 + $0x88] sm:$0xff]
    %v42 = vld [vmem:[%s1 + $0x90] sm:$0xff]
    %v43 = vld [vmem:[%s1 + $0x98] sm:$0xff]
    %v44 = vld [vmem:[%s1 + $0xa0] sm:$0xff]
    %v45 = vld [vmem:[%s1 + $0xa8] sm:$0xff]
    %v46 = vld [vmem:[%s1 + $0xb0] sm:$0xff]
    %v47 = vld [vmem:[%s1 + $0xb8] sm:$0xff]
    %v48 = vld [vmem:[%s1 + $0xc0] sm:$0xff]
    %v49 = vld [vmem:[%s1 + $0xc8] sm:$0xff]
    %v50 = vld [vmem:[%s1 + $0xd0] sm:$0xff]
    %v51 = vld [vmem:[%s1 + $0xd8] sm:$0xff]
    %v52 = vld [vmem:[%s1 + $0xe0] sm:$0xff]
    %v53 = vld [vmem:[%s1 + $0xe8] sm:$0xff]
    %v54 = vld [vmem:[%s1 + $0xf0] sm:$0xff]
    %v55 = vld [vmem:[%s1 + $0xf8] sm:$0xff]
    %v56 = vld [vmem:[%s2] sm:$0xff]
    %v57 = vld [vmem:[%s2 + $0x8] sm:$0xff]
    %v60 = vlaneseq
    %v61 = vshrl.u32 %v60, 7
    %v62 = vsub.s32 0, %v61
    %v63 = vrot.slane %v56, %v62
    %v64 = vlaneseq
    %v65 = vshrl.u32 %v64, 7
    %v66 = vsub.s32 1, %v65
    %v67 = vrot.slane %v56, %v66
    %v68 = vlaneseq
    %v69 = vshrl.u32 %v68, 7
    %v70 = vsub.s32 2, %v69
    %v71 = vrot.slane %v56, %v70
    %v72 = vlaneseq
    %v73 = vshrl.u32 %v72, 7
    %v74 = vsub.s32 3, %v73
    %v75 = vrot.slane %v56, %v74
    %v76 = vlaneseq
    %v77 = vshrl.u32 %v76, 7
    %v78 = vsub.s32 4, %v77
    %v79 = vrot.slane %v56, %v78
    %v80 = vlaneseq
    %v81 = vshrl.u32 %v80, 7
    %v82 = vsub.s32 5, %v81
    %v83 = vrot.slane %v56, %v82
    %v84 = vlaneseq
    %v85 = vshrl.u32 %v84, 7
    %v86 = vsub.s32 6, %v85
    %v87 = vrot.slane %v56, %v86
    %v88 = vlaneseq
    %v89 = vshrl.u32 %v88, 7
    %v90 = vsub.s32 7, %v89
    %v91 = vrot.slane %v56, %v90
    %v92 = vlaneseq
    %v93 = vshrl.u32 %v92, 7
    %v94 = vsub.s32 0, %v93
    %v95 = vrot.slane %v57, %v94
    %v96 = vlaneseq
    %v97 = vshrl.u32 %v96, 7
    %v98 = vsub.s32 1, %v97
    %v99 = vrot.slane %v57, %v98
    %v100 = vlaneseq
    %v101 = vshrl.u32 %v100, 7
    %v102 = vsub.s32 2, %v101
    %v103 = vrot.slane %v57, %v102
    %v104 = vlaneseq
    %v105 = vshrl.u32 %v104, 7
    %v106 = vsub.s32 3, %v105
    %v107 = vrot.slane %v57, %v106
    %v108 = vlaneseq
    %v109 = vshrl.u32 %v108, 7
    %v110 = vsub.s32 4, %v109
    %v111 = vrot.slane %v57, %v110
    %v112 = vlaneseq
    %v113 = vshrl.u32 %v112, 7
    %v114 = vsub.s32 5, %v113
    %v115 = vrot.slane %v57, %v114
    %v116 = vlaneseq
    %v117 = vshrl.u32 %v116, 7
    %v118 = vsub.s32 6, %v117
    %v119 = vrot.slane %v57, %v118
    %v120 = vlaneseq
    %v121 = vshrl.u32 %v120, 7
    %v122 = vsub.s32 7, %v121
    %v123 = vrot.slane %v57, %v122
    %v172 = vunpack.c.l.b16 %v24
    %v173 = vunpack.c.h.b16 %v24
    %v174 = vunpack.c.l.b16 %v25
    %v175 = vunpack.c.h.b16 %v25
    %v176 = vunpack.c.l.b16 %v26
    %v177 = vunpack.c.h.b16 %v26
    %v178 = vunpack.c.l.b16 %v27
    %v179 = vunpack.c.h.b16 %v27
    %v180 = vunpack.c.l.b16 %v28
    %v181 = vunpack.c.h.b16 %v28
    %v182 = vunpack.c.l.b16 %v29
    %v183 = vunpack.c.h.b16 %v29
    %v184 = vunpack.c.l.b16 %v30
    %v185 = vunpack.c.h.b16 %v30
    %v186 = vunpack.c.l.b16 %v31
    %v187 = vunpack.c.h.b16 %v31
    %v188 = vunpack.c.l.b16 %v32
    %v189 = vunpack.c.h.b16 %v32
    %v190 = vunpack.c.l.b16 %v33
    %v191 = vunpack.c.h.b16 %v33
    %v192 = vunpack.c.l.b16 %v34
    %v193 = vunpack.c.h.b16 %v34
    %v194 = vunpack.c.l.b16 %v35
    %v195 = vunpack.c.h.b16 %v35
    %v196 = vunpack.c.l.b16 %v36
    %v197 = vunpack.c.h.b16 %v36
    %v198 = vunpack.c.l.b16 %v37
    %v199 = vunpack.c.h.b16 %v37
    %v200 = vunpack.c.l.b16 %v38
    %v201 = vunpack.c.h.b16 %v38
    %v202 = vunpack.c.l.b16 %v39
    %v203 = vunpack.c.h.b16 %v39
    %v204 = vunpack.c.l.b16 %v40
    %v205 = vunpack.c.h.b16 %v40
    %v206 = vunpack.c.l.b16 %v41
    %v207 = vunpack.c.h.b16 %v41
    %v208 = vunpack.c.l.b16 %v42
    %v209 = vunpack.c.h.b16 %v42
    %v210 = vunpack.c.l.b16 %v43
    %v211 = vunpack.c.h.b16 %v43
    %v212 = vunpack.c.l.b16 %v44
    %v213 = vunpack.c.h.b16 %v44
    %v214 = vunpack.c.l.b16 %v45
    %v215 = vunpack.c.h.b16 %v45
    %v216 = vunpack.c.l.b16 %v46
    %v217 = vunpack.c.h.b16 %v46
    %v218 = vunpack.c.l.b16 %v47
    %v219 = vunpack.c.h.b16 %v47
    %v220 = vunpack.c.l.b16 %v48
    %v221 = vunpack.c.h.b16 %v48
    %v222 = vunpack.c.l.b16 %v49
    %v223 = vunpack.c.h.b16 %v49
    %v224 = vunpack.c.l.b16 %v50
    %v225 = vunpack.c.h.b16 %v50
    %v226 = vunpack.c.l.b16 %v51
    %v227 = vunpack.c.h.b16 %v51
    %v228 = vunpack.c.l.b16 %v52
    %v229 = vunpack.c.h.b16 %v52
    %v230 = vunpack.c.l.b16 %v53
    %v231 = vunpack.c.h.b16 %v53
    %v232 = vunpack.c.l.b16 %v54
    %v233 = vunpack.c.h.b16 %v54
    %v234 = vunpack.c.l.b16 %v55
    %v235 = vunpack.c.h.b16 %v55
    %v236 = vpack.c.b16 %v188, %v172
    %v237 = vpack.c.b16 %v189, %v173
    %v238 = vpack.c.b16 %v190, %v174
    %v239 = vpack.c.b16 %v191, %v175
    %v240 = vpack.c.b16 %v192, %v176
    %v241 = vpack.c.b16 %v193, %v177
    %v242 = vpack.c.b16 %v194, %v178
    %v243 = vpack.c.b16 %v195, %v179
    %v244 = vpack.c.b16 %v196, %v180
    %v245 = vpack.c.b16 %v197, %v181
    %v246 = vpack.c.b16 %v198, %v182
    %v247 = vpack.c.b16 %v199, %v183
    %v248 = vpack.c.b16 %v200, %v184
    %v249 = vpack.c.b16 %v201, %v185
    %v250 = vpack.c.b16 %v202, %v186
    %v251 = vpack.c.b16 %v203, %v187
    %v252 = vpack.c.b16 %v220, %v204
    %v253 = vpack.c.b16 %v221, %v205
    %v254 = vpack.c.b16 %v222, %v206
    %v255 = vpack.c.b16 %v223, %v207
    %v256 = vpack.c.b16 %v224, %v208
    %v257 = vpack.c.b16 %v225, %v209
    %v258 = vpack.c.b16 %v226, %v210
    %v259 = vpack.c.b16 %v227, %v211
    %v260 = vpack.c.b16 %v228, %v212
    %v261 = vpack.c.b16 %v229, %v213
    %v262 = vpack.c.b16 %v230, %v214
    %v263 = vpack.c.b16 %v231, %v215
    %v264 = vpack.c.b16 %v232, %v216
    %v265 = vpack.c.b16 %v233, %v217
    %v266 = vpack.c.b16 %v234, %v218
    %v267 = vpack.c.b16 %v235, %v219
    %vm300 = vcmask 261120
    %v302 = vsel %vm300, %v23, 0
    %304 = vmatprep.subr.bf16.mxu0 %v237
    %305 = vmatpush1.bf16.msra.mxu0 %v236
    %306 = vmatprep.subr.bf16.mxu0 %v253
    %307 = vmatpush1.bf16.msra.mxu0 %v252
    %308 = vmatprep.subr.bf16.mxu0 0
    %309 = vmatpush1.bf16.msra.mxu0 0
    %310 = vmatprep.subr.bf16.mxu0 0
    %311 = vmatpush1.bf16.msra.mxu0 0
    %312 = vmatprep.subr.bf16.mxu0 0
    %313 = vmatpush1.bf16.msra.mxu0 0
    %314 = vmatprep.subr.bf16.mxu0 0
    %315 = vmatpush1.bf16.msra.mxu0 0
    %316 = vmatprep.subr.bf16.mxu0 0
    %317 = vmatpush1.bf16.msra.mxu0 0
    %318 = vmatprep.subr.bf16.mxu0 0
    %319 = vmatpush1.bf16.msra.mxu0 0
    %320 = vmatprep.subr.bf16.mxu0 0
    %321 = vmatpush1.bf16.msra.mxu0 0
    %322 = vmatprep.subr.bf16.mxu0 0
    %323 = vmatpush1.bf16.msra.mxu0 0
    %324 = vmatprep.subr.bf16.mxu0 0
    %325 = vmatpush1.bf16.msra.mxu0 0
    %326 = vmatprep.subr.bf16.mxu0 0
    %327 = vmatpush1.bf16.msra.mxu0 0
    %328 = vmatprep.subr.bf16.mxu0 0
    %329 = vmatpush1.bf16.msra.mxu0 0
    %330 = vmatprep.subr.bf16.mxu0 0
    %331 = vmatpush1.bf16.msra.mxu0 0
    %332 = vmatprep.subr.bf16.mxu0 0
    %333 = vmatpush1.bf16.msra.mxu0 0
    %334 = vmatprep.subr.bf16.mxu0 0
    %335 = vmatpush1.bf16.msra.mxu0 0
    %336 = vmatprep.mubr.bf16.mxu0 0
    %337 = vmatmul.mubr.bf16.gmra.mrb[0].mxu0 %v302
    %v338 = vpop.f32.mrb[0].mxu0
    %v339 = vadd.f32 %v63, %v338
    %v340 = vpop.f32.mrb[0].mxu0
    %v341 = vadd.f32 %v67, %v340
    %v342 = vpop.f32.mrb[0].mxu0
    %v343 = vpop.f32.mrb[0].mxu0
    %344 = vdwg.mxu0
    %345 = vmatprep.subr.bf16.mxu0 %v239
    %346 = vmatpush1.bf16.msra.mxu0 %v238
    %347 = vmatprep.subr.bf16.mxu0 %v255
    %348 = vmatpush1.bf16.msra.mxu0 %v254
    %349 = vmatprep.subr.bf16.mxu0 0
    %350 = vmatpush1.bf16.msra.mxu0 0
    %351 = vmatprep.subr.bf16.mxu0 0
    %352 = vmatpush1.bf16.msra.mxu0 0
    %353 = vmatprep.subr.bf16.mxu0 0
    %354 = vmatpush1.bf16.msra.mxu0 0
    %355 = vmatprep.subr.bf16.mxu0 0
    %356 = vmatpush1.bf16.msra.mxu0 0
    %357 = vmatprep.subr.bf16.mxu0 0
    %358 = vmatpush1.bf16.msra.mxu0 0
    %359 = vmatprep.subr.bf16.mxu0 0
    %360 = vmatpush1.bf16.msra.mxu0 0
    %361 = vmatprep.subr.bf16.mxu0 0
    %362 = vmatpush1.bf16.msra.mxu0 0
    %363 = vmatprep.subr.bf16.mxu0 0
    %364 = vmatpush1.bf16.msra.mxu0 0
    %365 = vmatprep.subr.bf16.mxu0 0
    %366 = vmatpush1.bf16.msra.mxu0 0
    %367 = vmatprep.subr.bf16.mxu0 0
    %368 = vmatpush1.bf16.msra.mxu0 0
    %369 = vmatprep.subr.bf16.mxu0 0
    %370 = vmatpush1.bf16.msra.mxu0 0
    %371 = vmatprep.subr.bf16.mxu0 0
    %372 = vmatpush1.bf16.msra.mxu0 0
    %373 = vmatprep.subr.bf16.mxu0 0
    %374 = vmatpush1.bf16.msra.mxu0 0
    %375 = vmatprep.subr.bf16.mxu0 0
    %376 = vmatpush1.bf16.msra.mxu0 0
    %377 = vmatprep.mubr.bf16.mxu0 0
    %378 = vmatmul.mubr.bf16.gmra.mrb[0].mxu0 %v302
    %v379 = vpop.f32.mrb[0].mxu0
    %v380 = vadd.f32 %v71, %v379
    %v381 = vpop.f32.mrb[0].mxu0
    %v382 = vadd.f32 %v75, %v381
    %v383 = vpop.f32.mrb[0].mxu0
    %v384 = vpop.f32.mrb[0].mxu0
    %385 = vdwg.mxu0
    %386 = vmatprep.subr.bf16.mxu0 %v241
    %387 = vmatpush1.bf16.msra.mxu0 %v240
    %388 = vmatprep.subr.bf16.mxu0 %v257
    %389 = vmatpush1.bf16.msra.mxu0 %v256
    %390 = vmatprep.subr.bf16.mxu0 0
    %391 = vmatpush1.bf16.msra.mxu0 0
    %392 = vmatprep.subr.bf16.mxu0 0
    %393 = vmatpush1.bf16.msra.mxu0 0
    %394 = vmatprep.subr.bf16.mxu0 0
    %395 = vmatpush1.bf16.msra.mxu0 0
    %396 = vmatprep.subr.bf16.mxu0 0
    %397 = vmatpush1.bf16.msra.mxu0 0
    %398 = vmatprep.subr.bf16.mxu0 0
    %399 = vmatpush1.bf16.msra.mxu0 0
    %400 = vmatprep.subr.bf16.mxu0 0
    %401 = vmatpush1.bf16.msra.mxu0 0
    %402 = vmatprep.subr.bf16.mxu0 0
    %403 = vmatpush1.bf16.msra.mxu0 0
    %404 = vmatprep.subr.bf16.mxu0 0
    %405 = vmatpush1.bf16.msra.mxu0 0
    %406 = vmatprep.subr.bf16.mxu0 0
    %407 = vmatpush1.bf16.msra.mxu0 0
    %408 = vmatprep.subr.bf16.mxu0 0
    %409 = vmatpush1.bf16.msra.mxu0 0
    %410 = vmatprep.subr.bf16.mxu0 0
    %411 = vmatpush1.bf16.msra.mxu0 0
    %412 = vmatprep.subr.bf16.mxu0 0
    %413 = vmatpush1.bf16.msra.mxu0 0
    %414 = vmatprep.subr.bf16.mxu0 0
    %415 = vmatpush1.bf16.msra.mxu0 0
    %416 = vmatprep.subr.bf16.mxu0 0
    %417 = vmatpush1.bf16.msra.mxu0 0
    %418 = vmatprep.mubr.bf16.mxu0 0
    %419 = vmatmul.mubr.bf16.gmra.mrb[0].mxu0 %v302
    %v420 = vpop.f32.mrb[0].mxu0
    %v421 = vadd.f32 %v79, %v420
    %v422 = vpop.f32.mrb[0].mxu0
    %v423 = vadd.f32 %v83, %v422
    %v424 = vpop.f32.mrb[0].mxu0
    %v425 = vpop.f32.mrb[0].mxu0
    %426 = vdwg.mxu0
    %427 = vmatprep.subr.bf16.mxu0 %v243
    %428 = vmatpush1.bf16.msra.mxu0 %v242
    %429 = vmatprep.subr.bf16.mxu0 %v259
    %430 = vmatpush1.bf16.msra.mxu0 %v258
    %431 = vmatprep.subr.bf16.mxu0 0
    %432 = vmatpush1.bf16.msra.mxu0 0
    %433 = vmatprep.subr.bf16.mxu0 0
    %434 = vmatpush1.bf16.msra.mxu0 0
    %435 = vmatprep.subr.bf16.mxu0 0
    %436 = vmatpush1.bf16.msra.mxu0 0
    %437 = vmatprep.subr.bf16.mxu0 0
    %438 = vmatpush1.bf16.msra.mxu0 0
    %439 = vmatprep.subr.bf16.mxu0 0
    %440 = vmatpush1.bf16.msra.mxu0 0
    %441 = vmatprep.subr.bf16.mxu0 0
    %442 = vmatpush1.bf16.msra.mxu0 0
    %443 = vmatprep.subr.bf16.mxu0 0
    %444 = vmatpush1.bf16.msra.mxu0 0
    %445 = vmatprep.subr.bf16.mxu0 0
    %446 = vmatpush1.bf16.msra.mxu0 0
    %447 = vmatprep.subr.bf16.mxu0 0
    %448 = vmatpush1.bf16.msra.mxu0 0
    %449 = vmatprep.subr.bf16.mxu0 0
    %450 = vmatpush1.bf16.msra.mxu0 0
    %451 = vmatprep.subr.bf16.mxu0 0
    %452 = vmatpush1.bf16.msra.mxu0 0
    %453 = vmatprep.subr.bf16.mxu0 0
    %454 = vmatpush1.bf16.msra.mxu0 0
    %455 = vmatprep.subr.bf16.mxu0 0
    %456 = vmatpush1.bf16.msra.mxu0 0
    %457 = vmatprep.subr.bf16.mxu0 0
    %458 = vmatpush1.bf16.msra.mxu0 0
    %459 = vmatprep.mubr.bf16.mxu0 0
    %460 = vmatmul.mubr.bf16.gmra.mrb[0].mxu0 %v302
    %v461 = vpop.f32.mrb[0].mxu0
    %v462 = vadd.f32 %v87, %v461
    %v463 = vpop.f32.mrb[0].mxu0
    %v464 = vadd.f32 %v91, %v463
    %v465 = vpop.f32.mrb[0].mxu0
    %v466 = vpop.f32.mrb[0].mxu0
    %467 = vdwg.mxu0
    %468 = vmatprep.subr.bf16.mxu0 %v245
    %469 = vmatpush1.bf16.msra.mxu0 %v244
    %470 = vmatprep.subr.bf16.mxu0 %v261
    %471 = vmatpush1.bf16.msra.mxu0 %v260
    %472 = vmatprep.subr.bf16.mxu0 0
    %473 = vmatpush1.bf16.msra.mxu0 0
    %474 = vmatprep.subr.bf16.mxu0 0
    %475 = vmatpush1.bf16.msra.mxu0 0
    %476 = vmatprep.subr.bf16.mxu0 0
    %477 = vmatpush1.bf16.msra.mxu0 0
    %478 = vmatprep.subr.bf16.mxu0 0
    %479 = vmatpush1.bf16.msra.mxu0 0
    %480 = vmatprep.subr.bf16.mxu0 0
    %481 = vmatpush1.bf16.msra.mxu0 0
    %482 = vmatprep.subr.bf16.mxu0 0
    %483 = vmatpush1.bf16.msra.mxu0 0
    %484 = vmatprep.subr.bf16.mxu0 0
    %485 = vmatpush1.bf16.msra.mxu0 0
    %486 = vmatprep.subr.bf16.mxu0 0
    %487 = vmatpush1.bf16.msra.mxu0 0
    %488 = vmatprep.subr.bf16.mxu0 0
    %489 = vmatpush1.bf16.msra.mxu0 0
    %490 = vmatprep.subr.bf16.mxu0 0
    %491 = vmatpush1.bf16.msra.mxu0 0
    %492 = vmatprep.subr.bf16.mxu0 0
    %493 = vmatpush1.bf16.msra.mxu0 0
    %494 = vmatprep.subr.bf16.mxu0 0
    %495 = vmatpush1.bf16.msra.mxu0 0
    %496 = vmatprep.subr.bf16.mxu0 0
    %497 = vmatpush1.bf16.msra.mxu0 0
    %498 = vmatprep.subr.bf16.mxu0 0
    %499 = vmatpush1.bf16.msra.mxu0 0
    %500 = vmatprep.mubr.bf16.mxu0 0
    %501 = vmatmul.mubr.bf16.gmra.mrb[0].mxu0 %v302
    %v502 = vpop.f32.mrb[0].mxu0
    %v503 = vadd.f32 %v95, %v502
    %v504 = vpop.f32.mrb[0].mxu0
    %v505 = vadd.f32 %v99, %v504
    %v506 = vpop.f32.mrb[0].mxu0
    %v507 = vpop.f32.mrb[0].mxu0
    %508 = vdwg.mxu0
    %509 = vmatprep.subr.bf16.mxu0 %v247
    %510 = vmatpush1.bf16.msra.mxu0 %v246
    %511 = vmatprep.subr.bf16.mxu0 %v263
    %512 = vmatpush1.bf16.msra.mxu0 %v262
    %513 = vmatprep.subr.bf16.mxu0 0
    %514 = vmatpush1.bf16.msra.mxu0 0
    %515 = vmatprep.subr.bf16.mxu0 0
    %516 = vmatpush1.bf16.msra.mxu0 0
    %517 = vmatprep.subr.bf16.mxu0 0
    %518 = vmatpush1.bf16.msra.mxu0 0
    %519 = vmatprep.subr.bf16.mxu0 0
    %520 = vmatpush1.bf16.msra.mxu0 0
    %521 = vmatprep.subr.bf16.mxu0 0
    %522 = vmatpush1.bf16.msra.mxu0 0
    %523 = vmatprep.subr.bf16.mxu0 0
    %524 = vmatpush1.bf16.msra.mxu0 0
    %525 = vmatprep.subr.bf16.mxu0 0
    %526 = vmatpush1.bf16.msra.mxu0 0
    %527 = vmatprep.subr.bf16.mxu0 0
    %528 = vmatpush1.bf16.msra.mxu0 0
    %529 = vmatprep.subr.bf16.mxu0 0
    %530 = vmatpush1.bf16.msra.mxu0 0
    %531 = vmatprep.subr.bf16.mxu0 0
    %532 = vmatpush1.bf16.msra.mxu0 0
    %533 = vmatprep.subr.bf16.mxu0 0
    %534 = vmatpush1.bf16.msra.mxu0 0
    %535 = vmatprep.subr.bf16.mxu0 0
    %536 = vmatpush1.bf16.msra.mxu0 0
    %537 = vmatprep.subr.bf16.mxu0 0
    %538 = vmatpush1.bf16.msra.mxu0 0
    %539 = vmatprep.subr.bf16.mxu0 0
    %540 = vmatpush1.bf16.msra.mxu0 0
    %541 = vmatprep.mubr.bf16.mxu0 0
    %542 = vmatmul.mubr.bf16.gmra.mrb[0].mxu0 %v302
    %v543 = vpop.f32.mrb[0].mxu0
    %v544 = vadd.f32 %v103, %v543
    %v545 = vpop.f32.mrb[0].mxu0
    %v546 = vadd.f32 %v107, %v545
    %v547 = vpop.f32.mrb[0].mxu0
    %v548 = vpop.f32.mrb[0].mxu0
    %549 = vdwg.mxu0
    %550 = vmatprep.subr.bf16.mxu0 %v249
    %551 = vmatpush1.bf16.msra.mxu0 %v248
    %552 = vmatprep.subr.bf16.mxu0 %v265
    %553 = vmatpush1.bf16.msra.mxu0 %v264
    %554 = vmatprep.subr.bf16.mxu0 0
    %555 = vmatpush1.bf16.msra.mxu0 0
    %556 = vmatprep.subr.bf16.mxu0 0
    %557 = vmatpush1.bf16.msra.mxu0 0
    %558 = vmatprep.subr.bf16.mxu0 0
    %559 = vmatpush1.bf16.msra.mxu0 0
    %560 = vmatprep.subr.bf16.mxu0 0
    %561 = vmatpush1.bf16.msra.mxu0 0
    %562 = vmatprep.subr.bf16.mxu0 0
    %563 = vmatpush1.bf16.msra.mxu0 0
    %564 = vmatprep.subr.bf16.mxu0 0
    %565 = vmatpush1.bf16.msra.mxu0 0
    %566 = vmatprep.subr.bf16.mxu0 0
    %567 = vmatpush1.bf16.msra.mxu0 0
    %568 = vmatprep.subr.bf16.mxu0 0
    %569 = vmatpush1.bf16.msra.mxu0 0
    %570 = vmatprep.subr.bf16.mxu0 0
    %571 = vmatpush1.bf16.msra.mxu0 0
    %572 = vmatprep.subr.bf16.mxu0 0
    %573 = vmatpush1.bf16.msra.mxu0 0
    %574 = vmatprep.subr.bf16.mxu0 0
    %575 = vmatpush1.bf16.msra.mxu0 0
    %576 = vmatprep.subr.bf16.mxu0 0
    %577 = vmatpush1.bf16.msra.mxu0 0
    %578 = vmatprep.subr.bf16.mxu0 0
    %579 = vmatpush1.bf16.msra.mxu0 0
    %580 = vmatprep.subr.bf16.mxu0 0
    %581 = vmatpush1.bf16.msra.mxu0 0
    %582 = vmatprep.mubr.bf16.mxu0 0
    %583 = vmatmul.mubr.bf16.gmra.mrb[0].mxu0 %v302
    %v584 = vpop.f32.mrb[0].mxu0
    %v585 = vadd.f32 %v111, %v584
    %v586 = vpop.f32.mrb[0].mxu0
    %v587 = vadd.f32 %v115, %v586
    %v588 = vpop.f32.mrb[0].mxu0
    %v589 = vpop.f32.mrb[0].mxu0
    %590 = vdwg.mxu0
    %591 = vmatprep.subr.bf16.mxu0 %v251
    %592 = vmatpush1.bf16.msra.mxu0 %v250
    %593 = vmatprep.subr.bf16.mxu0 %v267
    %594 = vmatpush1.bf16.msra.mxu0 %v266
    %595 = vmatprep.subr.bf16.mxu0 0
    %596 = vmatpush1.bf16.msra.mxu0 0
    %597 = vmatprep.subr.bf16.mxu0 0
    %598 = vmatpush1.bf16.msra.mxu0 0
    %599 = vmatprep.subr.bf16.mxu0 0
    %600 = vmatpush1.bf16.msra.mxu0 0
    %601 = vmatprep.subr.bf16.mxu0 0
    %602 = vmatpush1.bf16.msra.mxu0 0
    %603 = vmatprep.subr.bf16.mxu0 0
    %604 = vmatpush1.bf16.msra.mxu0 0
    %605 = vmatprep.subr.bf16.mxu0 0
    %606 = vmatpush1.bf16.msra.mxu0 0
    %607 = vmatprep.subr.bf16.mxu0 0
    %608 = vmatpush1.bf16.msra.mxu0 0
    %609 = vmatprep.subr.bf16.mxu0 0
    %610 = vmatpush1.bf16.msra.mxu0 0
    %611 = vmatprep.subr.bf16.mxu0 0
    %612 = vmatpush1.bf16.msra.mxu0 0
    %613 = vmatprep.subr.bf16.mxu0 0
    %614 = vmatpush1.bf16.msra.mxu0 0
    %615 = vmatprep.subr.bf16.mxu0 0
    %616 = vmatpush1.bf16.msra.mxu0 0
    %617 = vmatprep.subr.bf16.mxu0 0
    %618 = vmatpush1.bf16.msra.mxu0 0
    %619 = vmatprep.subr.bf16.mxu0 0
    %620 = vmatpush1.bf16.msra.mxu0 0
    %621 = vmatprep.subr.bf16.mxu0 0
    %622 = vmatpush1.bf16.msra.mxu0 0
    %623 = vmatprep.mubr.bf16.mxu0 0
    %624 = vmatmul.mubr.bf16.gmra.mrb[0].mxu0 %v302
    %v625 = vpop.f32.mrb[0].mxu0
    %v626 = vadd.f32 %v119, %v625
    %v627 = vpop.f32.mrb[0].mxu0
    %v628 = vadd.f32 %v123, %v627
    %v629 = vpop.f32.mrb[0].mxu0
    %v630 = vpop.f32.mrb[0].mxu0
    %631 = vdwg.mxu0
    %v632 = vmul.f32 %v339, 0.01
    %v633 = vmul.f32 %v341, 0.01
    %v634 = vmul.f32 %v380, 0.01
    %v635 = vmul.f32 %v382, 0.01
    %v636 = vmul.f32 %v421, 0.01
    %v637 = vmul.f32 %v423, 0.01
    %v638 = vmul.f32 %v462, 0.01
    %v639 = vmul.f32 %v464, 0.01
    %v640 = vmul.f32 %v503, 0.01
    %v641 = vmul.f32 %v505, 0.01
    %v642 = vmul.f32 %v544, 0.01
    %v643 = vmul.f32 %v546, 0.01
    %v644 = vmul.f32 %v585, 0.01
    %v645 = vmul.f32 %v587, 0.01
    %v646 = vmul.f32 %v626, 0.01
    %v647 = vmul.f32 %v628, 0.01
    %v648 = vmax.f32 %v339, %v632
    %v649 = vmax.f32 %v341, %v633
    %v650 = vmax.f32 %v380, %v634
    %v651 = vmax.f32 %v382, %v635
    %v652 = vmax.f32 %v421, %v636
    %v653 = vmax.f32 %v423, %v637
    %v654 = vmax.f32 %v462, %v638
    %v655 = vmax.f32 %v464, %v639
    %v656 = vmax.f32 %v503, %v640
    %v657 = vmax.f32 %v505, %v641
    %v658 = vmax.f32 %v544, %v642
    %v659 = vmax.f32 %v546, %v643
    %v660 = vmax.f32 %v585, %v644
    %v661 = vmax.f32 %v587, %v645
    %v662 = vmax.f32 %v626, %v646
    %v663 = vmax.f32 %v628, %v647
    %v664 = vpack.c.bf16 %v648, %v648
    %v665 = vpack.c.bf16 %v649, %v649
    %v666 = vpack.c.bf16 %v650, %v650
    %v667 = vpack.c.bf16 %v651, %v651
    %v668 = vpack.c.bf16 %v652, %v652
    %v669 = vpack.c.bf16 %v653, %v653
    %v670 = vpack.c.bf16 %v654, %v654
    %v671 = vpack.c.bf16 %v655, %v655
    %v672 = vpack.c.bf16 %v656, %v656
    %v673 = vpack.c.bf16 %v657, %v657
    %v674 = vpack.c.bf16 %v658, %v658
    %v675 = vpack.c.bf16 %v659, %v659
    %v676 = vpack.c.bf16 %v660, %v660
    %v677 = vpack.c.bf16 %v661, %v661
    %v678 = vpack.c.bf16 %v662, %v662
    %v679 = vpack.c.bf16 %v663, %v663
    %v680 = vld [vmem:[%s3] sm:$0xf]
    %v681 = vld [vmem:[%s3 + $0x4] sm:$0xf]
    %v682 = vld [vmem:[%s3 + $0x8] sm:$0xf]
    %v683 = vld [vmem:[%s3 + $0xc] sm:$0xf]
    %v684 = vld [vmem:[%s3 + $0x10] sm:$0xf]
    %v685 = vld [vmem:[%s3 + $0x14] sm:$0xf]
    %v686 = vld [vmem:[%s3 + $0x18] sm:$0xf]
    %v687 = vld [vmem:[%s3 + $0x1c] sm:$0xf]
    %v688 = vld [vmem:[%s3 + $0x20] sm:$0xf]
    %v689 = vld [vmem:[%s3 + $0x24] sm:$0xf]
    %v690 = vld [vmem:[%s3 + $0x28] sm:$0xf]
    %v691 = vld [vmem:[%s3 + $0x2c] sm:$0xf]
    %v692 = vld [vmem:[%s3 + $0x30] sm:$0xf]
    %v693 = vld [vmem:[%s3 + $0x34] sm:$0xf]
    %v694 = vld [vmem:[%s3 + $0x38] sm:$0xf]
    %v695 = vld [vmem:[%s3 + $0x3c] sm:$0xf]
    %v696 = vld [vmem:[%s3 + $0x40] sm:$0xf]
    %v697 = vld [vmem:[%s3 + $0x44] sm:$0xf]
    %v698 = vld [vmem:[%s3 + $0x48] sm:$0xf]
    %v699 = vld [vmem:[%s3 + $0x4c] sm:$0xf]
    %v700 = vld [vmem:[%s3 + $0x50] sm:$0xf]
    %v701 = vld [vmem:[%s3 + $0x54] sm:$0xf]
    %v702 = vld [vmem:[%s3 + $0x58] sm:$0xf]
    %v703 = vld [vmem:[%s3 + $0x5c] sm:$0xf]
    %v704 = vld [vmem:[%s3 + $0x60] sm:$0xf]
    %v705 = vld [vmem:[%s3 + $0x64] sm:$0xf]
    %v706 = vld [vmem:[%s3 + $0x68] sm:$0xf]
    %v707 = vld [vmem:[%s3 + $0x6c] sm:$0xf]
    %v708 = vld [vmem:[%s3 + $0x70] sm:$0xf]
    %v709 = vld [vmem:[%s3 + $0x74] sm:$0xf]
    %v710 = vld [vmem:[%s3 + $0x78] sm:$0xf]
    %v711 = vld [vmem:[%s3 + $0x7c] sm:$0xf]
    %v712 = vld [vmem:[%s3 + $0x80] sm:$0xf]
    %v713 = vld [vmem:[%s3 + $0x84] sm:$0xf]
    %v714 = vld [vmem:[%s3 + $0x88] sm:$0xf]
    %v715 = vld [vmem:[%s3 + $0x8c] sm:$0xf]
    %v716 = vld [vmem:[%s3 + $0x90] sm:$0xf]
    %v717 = vld [vmem:[%s3 + $0x94] sm:$0xf]
    %v718 = vld [vmem:[%s3 + $0x98] sm:$0xf]
    %v719 = vld [vmem:[%s3 + $0x9c] sm:$0xf]
    %v720 = vld [vmem:[%s3 + $0xa0] sm:$0xf]
    %v721 = vld [vmem:[%s3 + $0xa4] sm:$0xf]
    %v722 = vld [vmem:[%s3 + $0xa8] sm:$0xf]
    %v723 = vld [vmem:[%s3 + $0xac] sm:$0xf]
    %v724 = vld [vmem:[%s3 + $0xb0] sm:$0xf]
    %v725 = vld [vmem:[%s3 + $0xb4] sm:$0xf]
    %v726 = vld [vmem:[%s3 + $0xb8] sm:$0xf]
    %v727 = vld [vmem:[%s3 + $0xbc] sm:$0xf]
    %v728 = vld [vmem:[%s3 + $0xc0] sm:$0xf]
    %v729 = vld [vmem:[%s3 + $0xc4] sm:$0xf]
    %v730 = vld [vmem:[%s3 + $0xc8] sm:$0xf]
    %v731 = vld [vmem:[%s3 + $0xcc] sm:$0xf]
    %v732 = vld [vmem:[%s3 + $0xd0] sm:$0xf]
    %v733 = vld [vmem:[%s3 + $0xd4] sm:$0xf]
    %v734 = vld [vmem:[%s3 + $0xd8] sm:$0xf]
    %v735 = vld [vmem:[%s3 + $0xdc] sm:$0xf]
    %v736 = vld [vmem:[%s3 + $0xe0] sm:$0xf]
    %v737 = vld [vmem:[%s3 + $0xe4] sm:$0xf]
    %v738 = vld [vmem:[%s3 + $0xe8] sm:$0xf]
    %v739 = vld [vmem:[%s3 + $0xec] sm:$0xf]
    %v740 = vld [vmem:[%s3 + $0xf0] sm:$0xf]
    %v741 = vld [vmem:[%s3 + $0xf4] sm:$0xf]
    %v742 = vld [vmem:[%s3 + $0xf8] sm:$0xf]
    %v743 = vld [vmem:[%s3 + $0xfc] sm:$0xf]
    %v744 = vld [vmem:[%s3 + $0x100] sm:$0xf]
    %v745 = vld [vmem:[%s3 + $0x104] sm:$0xf]
    %v746 = vld [vmem:[%s3 + $0x108] sm:$0xf]
    %v747 = vld [vmem:[%s3 + $0x10c] sm:$0xf]
    %v748 = vld [vmem:[%s3 + $0x110] sm:$0xf]
    %v749 = vld [vmem:[%s3 + $0x114] sm:$0xf]
    %v750 = vld [vmem:[%s3 + $0x118] sm:$0xf]
    %v751 = vld [vmem:[%s3 + $0x11c] sm:$0xf]
    %v752 = vld [vmem:[%s3 + $0x120] sm:$0xf]
    %v753 = vld [vmem:[%s3 + $0x124] sm:$0xf]
    %v754 = vld [vmem:[%s3 + $0x128] sm:$0xf]
    %v755 = vld [vmem:[%s3 + $0x12c] sm:$0xf]
    %v756 = vld [vmem:[%s3 + $0x130] sm:$0xf]
    %v757 = vld [vmem:[%s3 + $0x134] sm:$0xf]
    %v758 = vld [vmem:[%s3 + $0x138] sm:$0xf]
    %v759 = vld [vmem:[%s3 + $0x13c] sm:$0xf]
    %v760 = vld [vmem:[%s3 + $0x140] sm:$0xf]
    %v761 = vld [vmem:[%s3 + $0x144] sm:$0xf]
    %v762 = vld [vmem:[%s3 + $0x148] sm:$0xf]
    %v763 = vld [vmem:[%s3 + $0x14c] sm:$0xf]
    %v764 = vld [vmem:[%s3 + $0x150] sm:$0xf]
    %v765 = vld [vmem:[%s3 + $0x154] sm:$0xf]
    %v766 = vld [vmem:[%s3 + $0x158] sm:$0xf]
    %v767 = vld [vmem:[%s3 + $0x15c] sm:$0xf]
    %v768 = vld [vmem:[%s3 + $0x160] sm:$0xf]
    %v769 = vld [vmem:[%s3 + $0x164] sm:$0xf]
    %v770 = vld [vmem:[%s3 + $0x168] sm:$0xf]
    %v771 = vld [vmem:[%s3 + $0x16c] sm:$0xf]
    %v772 = vld [vmem:[%s3 + $0x170] sm:$0xf]
    %v773 = vld [vmem:[%s3 + $0x174] sm:$0xf]
    %v774 = vld [vmem:[%s3 + $0x178] sm:$0xf]
    %v775 = vld [vmem:[%s3 + $0x17c] sm:$0xf]
    %v776 = vld [vmem:[%s3 + $0x180] sm:$0xf]
    %v777 = vld [vmem:[%s3 + $0x184] sm:$0xf]
    %v778 = vld [vmem:[%s3 + $0x188] sm:$0xf]
    %v779 = vld [vmem:[%s3 + $0x18c] sm:$0xf]
    %v780 = vld [vmem:[%s3 + $0x190] sm:$0xf]
    %v781 = vld [vmem:[%s3 + $0x194] sm:$0xf]
    %v782 = vld [vmem:[%s3 + $0x198] sm:$0xf]
    %v783 = vld [vmem:[%s3 + $0x19c] sm:$0xf]
    %v784 = vld [vmem:[%s3 + $0x1a0] sm:$0xf]
    %v785 = vld [vmem:[%s3 + $0x1a4] sm:$0xf]
    %v786 = vld [vmem:[%s3 + $0x1a8] sm:$0xf]
    %v787 = vld [vmem:[%s3 + $0x1ac] sm:$0xf]
    %v788 = vld [vmem:[%s3 + $0x1b0] sm:$0xf]
    %v789 = vld [vmem:[%s3 + $0x1b4] sm:$0xf]
    %v790 = vld [vmem:[%s3 + $0x1b8] sm:$0xf]
    %v791 = vld [vmem:[%s3 + $0x1bc] sm:$0xf]
    %v792 = vld [vmem:[%s3 + $0x1c0] sm:$0xf]
    %v793 = vld [vmem:[%s3 + $0x1c4] sm:$0xf]
    %v794 = vld [vmem:[%s3 + $0x1c8] sm:$0xf]
    %v795 = vld [vmem:[%s3 + $0x1cc] sm:$0xf]
    %v796 = vld [vmem:[%s3 + $0x1d0] sm:$0xf]
    %v797 = vld [vmem:[%s3 + $0x1d4] sm:$0xf]
    %v798 = vld [vmem:[%s3 + $0x1d8] sm:$0xf]
    %v799 = vld [vmem:[%s3 + $0x1dc] sm:$0xf]
    %v800 = vld [vmem:[%s3 + $0x1e0] sm:$0xf]
    %v801 = vld [vmem:[%s3 + $0x1e4] sm:$0xf]
    %v802 = vld [vmem:[%s3 + $0x1e8] sm:$0xf]
    %v803 = vld [vmem:[%s3 + $0x1ec] sm:$0xf]
    %v804 = vld [vmem:[%s3 + $0x1f0] sm:$0xf]
    %v805 = vld [vmem:[%s3 + $0x1f4] sm:$0xf]
    %v806 = vld [vmem:[%s3 + $0x1f8] sm:$0xf]
    %v807 = vld [vmem:[%s3 + $0x1fc] sm:$0xf]
    %v808 = vld [vmem:[%s3 + $0x200] sm:$0xf]
    %v809 = vld [vmem:[%s3 + $0x204] sm:$0xf]
    %v810 = vld [vmem:[%s3 + $0x208] sm:$0xf]
    %v811 = vld [vmem:[%s3 + $0x20c] sm:$0xf]
    %v812 = vld [vmem:[%s3 + $0x210] sm:$0xf]
    %v813 = vld [vmem:[%s3 + $0x214] sm:$0xf]
    %v814 = vld [vmem:[%s3 + $0x218] sm:$0xf]
    %v815 = vld [vmem:[%s3 + $0x21c] sm:$0xf]
    %v816 = vld [vmem:[%s3 + $0x220] sm:$0xf]
    %v817 = vld [vmem:[%s3 + $0x224] sm:$0xf]
    %v818 = vld [vmem:[%s3 + $0x228] sm:$0xf]
    %v819 = vld [vmem:[%s3 + $0x22c] sm:$0xf]
    %v820 = vld [vmem:[%s3 + $0x230] sm:$0xf]
    %v821 = vld [vmem:[%s3 + $0x234] sm:$0xf]
    %v822 = vld [vmem:[%s3 + $0x238] sm:$0xf]
    %v823 = vld [vmem:[%s3 + $0x23c] sm:$0xf]
    %v824 = vld [vmem:[%s3 + $0x240] sm:$0xf]
    %v825 = vld [vmem:[%s3 + $0x244] sm:$0xf]
    %v826 = vld [vmem:[%s3 + $0x248] sm:$0xf]
    %v827 = vld [vmem:[%s3 + $0x24c] sm:$0xf]
    %v828 = vld [vmem:[%s3 + $0x250] sm:$0xf]
    %v829 = vld [vmem:[%s3 + $0x254] sm:$0xf]
    %v830 = vld [vmem:[%s3 + $0x258] sm:$0xf]
    %v831 = vld [vmem:[%s3 + $0x25c] sm:$0xf]
    %v832 = vld [vmem:[%s3 + $0x260] sm:$0xf]
    %v833 = vld [vmem:[%s3 + $0x264] sm:$0xf]
    %v834 = vld [vmem:[%s3 + $0x268] sm:$0xf]
    %v835 = vld [vmem:[%s3 + $0x26c] sm:$0xf]
    %v836 = vld [vmem:[%s3 + $0x270] sm:$0xf]
    %v837 = vld [vmem:[%s3 + $0x274] sm:$0xf]
    %v838 = vld [vmem:[%s3 + $0x278] sm:$0xf]
    %v839 = vld [vmem:[%s3 + $0x27c] sm:$0xf]
    %v840 = vld [vmem:[%s3 + $0x280] sm:$0xf]
    %v841 = vld [vmem:[%s3 + $0x284] sm:$0xf]
    %v842 = vld [vmem:[%s3 + $0x288] sm:$0xf]
    %v843 = vld [vmem:[%s3 + $0x28c] sm:$0xf]
    %v844 = vld [vmem:[%s3 + $0x290] sm:$0xf]
    %v845 = vld [vmem:[%s3 + $0x294] sm:$0xf]
    %v846 = vld [vmem:[%s3 + $0x298] sm:$0xf]
    %v847 = vld [vmem:[%s3 + $0x29c] sm:$0xf]
    %v848 = vld [vmem:[%s3 + $0x2a0] sm:$0xf]
    %v849 = vld [vmem:[%s3 + $0x2a4] sm:$0xf]
    %v850 = vld [vmem:[%s3 + $0x2a8] sm:$0xf]
    %v851 = vld [vmem:[%s3 + $0x2ac] sm:$0xf]
    %v852 = vld [vmem:[%s3 + $0x2b0] sm:$0xf]
    %v853 = vld [vmem:[%s3 + $0x2b4] sm:$0xf]
    %v854 = vld [vmem:[%s3 + $0x2b8] sm:$0xf]
    %v855 = vld [vmem:[%s3 + $0x2bc] sm:$0xf]
    %v856 = vld [vmem:[%s3 + $0x2c0] sm:$0xf]
    %v857 = vld [vmem:[%s3 + $0x2c4] sm:$0xf]
    %v858 = vld [vmem:[%s3 + $0x2c8] sm:$0xf]
    %v859 = vld [vmem:[%s3 + $0x2cc] sm:$0xf]
    %v860 = vld [vmem:[%s3 + $0x2d0] sm:$0xf]
    %v861 = vld [vmem:[%s3 + $0x2d4] sm:$0xf]
    %v862 = vld [vmem:[%s3 + $0x2d8] sm:$0xf]
    %v863 = vld [vmem:[%s3 + $0x2dc] sm:$0xf]
    %v864 = vld [vmem:[%s3 + $0x2e0] sm:$0xf]
    %v865 = vld [vmem:[%s3 + $0x2e4] sm:$0xf]
    %v866 = vld [vmem:[%s3 + $0x2e8] sm:$0xf]
    %v867 = vld [vmem:[%s3 + $0x2ec] sm:$0xf]
    %v868 = vld [vmem:[%s3 + $0x2f0] sm:$0xf]
    %v869 = vld [vmem:[%s3 + $0x2f4] sm:$0xf]
    %v870 = vld [vmem:[%s3 + $0x2f8] sm:$0xf]
    %v871 = vld [vmem:[%s3 + $0x2fc] sm:$0xf]
    %v872 = vld [vmem:[%s3 + $0x300] sm:$0xf]
    %v873 = vld [vmem:[%s3 + $0x304] sm:$0xf]
    %v874 = vld [vmem:[%s3 + $0x308] sm:$0xf]
    %v875 = vld [vmem:[%s3 + $0x30c] sm:$0xf]
    %v876 = vld [vmem:[%s3 + $0x310] sm:$0xf]
    %v877 = vld [vmem:[%s3 + $0x314] sm:$0xf]
    %v878 = vld [vmem:[%s3 + $0x318] sm:$0xf]
    %v879 = vld [vmem:[%s3 + $0x31c] sm:$0xf]
    %v880 = vld [vmem:[%s3 + $0x320] sm:$0xf]
    %v881 = vld [vmem:[%s3 + $0x324] sm:$0xf]
    %v882 = vld [vmem:[%s3 + $0x328] sm:$0xf]
    %v883 = vld [vmem:[%s3 + $0x32c] sm:$0xf]
    %v884 = vld [vmem:[%s3 + $0x330] sm:$0xf]
    %v885 = vld [vmem:[%s3 + $0x334] sm:$0xf]
    %v886 = vld [vmem:[%s3 + $0x338] sm:$0xf]
    %v887 = vld [vmem:[%s3 + $0x33c] sm:$0xf]
    %v888 = vld [vmem:[%s3 + $0x340] sm:$0xf]
    %v889 = vld [vmem:[%s3 + $0x344] sm:$0xf]
    %v890 = vld [vmem:[%s3 + $0x348] sm:$0xf]
    %v891 = vld [vmem:[%s3 + $0x34c] sm:$0xf]
    %v892 = vld [vmem:[%s3 + $0x350] sm:$0xf]
    %v893 = vld [vmem:[%s3 + $0x354] sm:$0xf]
    %v894 = vld [vmem:[%s3 + $0x358] sm:$0xf]
    %v895 = vld [vmem:[%s3 + $0x35c] sm:$0xf]
    %v896 = vld [vmem:[%s3 + $0x360] sm:$0xf]
    %v897 = vld [vmem:[%s3 + $0x364] sm:$0xf]
    %v898 = vld [vmem:[%s3 + $0x368] sm:$0xf]
    %v899 = vld [vmem:[%s3 + $0x36c] sm:$0xf]
    %v900 = vld [vmem:[%s3 + $0x370] sm:$0xf]
    %v901 = vld [vmem:[%s3 + $0x374] sm:$0xf]
    %v902 = vld [vmem:[%s3 + $0x378] sm:$0xf]
    %v903 = vld [vmem:[%s3 + $0x37c] sm:$0xf]
    %v904 = vld [vmem:[%s3 + $0x380] sm:$0xf]
    %v905 = vld [vmem:[%s3 + $0x384] sm:$0xf]
    %v906 = vld [vmem:[%s3 + $0x388] sm:$0xf]
    %v907 = vld [vmem:[%s3 + $0x38c] sm:$0xf]
    %v908 = vld [vmem:[%s3 + $0x390] sm:$0xf]
    %v909 = vld [vmem:[%s3 + $0x394] sm:$0xf]
    %v910 = vld [vmem:[%s3 + $0x398] sm:$0xf]
    %v911 = vld [vmem:[%s3 + $0x39c] sm:$0xf]
    %v912 = vld [vmem:[%s3 + $0x3a0] sm:$0xf]
    %v913 = vld [vmem:[%s3 + $0x3a4] sm:$0xf]
    %v914 = vld [vmem:[%s3 + $0x3a8] sm:$0xf]
    %v915 = vld [vmem:[%s3 + $0x3ac] sm:$0xf]
    %v916 = vld [vmem:[%s3 + $0x3b0] sm:$0xf]
    %v917 = vld [vmem:[%s3 + $0x3b4] sm:$0xf]
    %v918 = vld [vmem:[%s3 + $0x3b8] sm:$0xf]
    %v919 = vld [vmem:[%s3 + $0x3bc] sm:$0xf]
    %v920 = vld [vmem:[%s3 + $0x3c0] sm:$0xf]
    %v921 = vld [vmem:[%s3 + $0x3c4] sm:$0xf]
    %v922 = vld [vmem:[%s3 + $0x3c8] sm:$0xf]
    %v923 = vld [vmem:[%s3 + $0x3cc] sm:$0xf]
    %v924 = vld [vmem:[%s3 + $0x3d0] sm:$0xf]
    %v925 = vld [vmem:[%s3 + $0x3d4] sm:$0xf]
    %v926 = vld [vmem:[%s3 + $0x3d8] sm:$0xf]
    %v927 = vld [vmem:[%s3 + $0x3dc] sm:$0xf]
    %v928 = vld [vmem:[%s3 + $0x3e0] sm:$0xf]
    %v929 = vld [vmem:[%s3 + $0x3e4] sm:$0xf]
    %v930 = vld [vmem:[%s3 + $0x3e8] sm:$0xf]
    %v931 = vld [vmem:[%s3 + $0x3ec] sm:$0xf]
    %v932 = vld [vmem:[%s3 + $0x3f0] sm:$0xf]
    %v933 = vld [vmem:[%s3 + $0x3f4] sm:$0xf]
    %v934 = vld [vmem:[%s3 + $0x3f8] sm:$0xf]
    %v935 = vld [vmem:[%s3 + $0x3fc] sm:$0xf]
    %v936 = vld [vmem:[%s4] sm:$0x1]
    %v938 = vlaneseq
    %v939 = vshrl.u32 %v938, 7
    %v940 = vsub.s32 0, %v939
    %v941 = vrot.slane %v936, %v940
    %v1199 = vunpack.c.l.b16 %v680
    %v1200 = vunpack.c.l.b16 %v681
    %v1201 = vunpack.c.l.b16 %v682
    %v1202 = vunpack.c.l.b16 %v683
    %v1203 = vunpack.c.l.b16 %v684
    %v1204 = vunpack.c.l.b16 %v685
    %v1205 = vunpack.c.l.b16 %v686
    %v1206 = vunpack.c.l.b16 %v687
    %v1207 = vunpack.c.l.b16 %v688
    %v1208 = vunpack.c.l.b16 %v689
    %v1209 = vunpack.c.l.b16 %v690
    %v1210 = vunpack.c.l.b16 %v691
    %v1211 = vunpack.c.l.b16 %v692
    %v1212 = vunpack.c.l.b16 %v693
    %v1213 = vunpack.c.l.b16 %v694
    %v1214 = vunpack.c.l.b16 %v695
    %v1215 = vunpack.c.l.b16 %v696
    %v1216 = vunpack.c.l.b16 %v697
    %v1217 = vunpack.c.l.b16 %v698
    %v1218 = vunpack.c.l.b16 %v699
    %v1219 = vunpack.c.l.b16 %v700
    %v1220 = vunpack.c.l.b16 %v701
    %v1221 = vunpack.c.l.b16 %v702
    %v1222 = vunpack.c.l.b16 %v703
    %v1223 = vunpack.c.l.b16 %v704
    %v1224 = vunpack.c.l.b16 %v705
    %v1225 = vunpack.c.l.b16 %v706
    %v1226 = vunpack.c.l.b16 %v707
    %v1227 = vunpack.c.l.b16 %v708
    %v1228 = vunpack.c.l.b16 %v709
    %v1229 = vunpack.c.l.b16 %v710
    %v1230 = vunpack.c.l.b16 %v711
    %v1231 = vunpack.c.l.b16 %v712
    %v1232 = vunpack.c.l.b16 %v713
    %v1233 = vunpack.c.l.b16 %v714
    %v1234 = vunpack.c.l.b16 %v715
    %v1235 = vunpack.c.l.b16 %v716
    %v1236 = vunpack.c.l.b16 %v717
    %v1237 = vunpack.c.l.b16 %v718
    %v1238 = vunpack.c.l.b16 %v719
    %v1239 = vunpack.c.l.b16 %v720
    %v1240 = vunpack.c.l.b16 %v721
    %v1241 = vunpack.c.l.b16 %v722
    %v1242 = vunpack.c.l.b16 %v723
    %v1243 = vunpack.c.l.b16 %v724
    %v1244 = vunpack.c.l.b16 %v725
    %v1245 = vunpack.c.l.b16 %v726
    %v1246 = vunpack.c.l.b16 %v727
    %v1247 = vunpack.c.l.b16 %v728
    %v1248 = vunpack.c.l.b16 %v729
    %v1249 = vunpack.c.l.b16 %v730
    %v1250 = vunpack.c.l.b16 %v731
    %v1251 = vunpack.c.l.b16 %v732
    %v1252 = vunpack.c.l.b16 %v733
    %v1253 = vunpack.c.l.b16 %v734
    %v1254 = vunpack.c.l.b16 %v735
    %v1255 = vunpack.c.l.b16 %v736
    %v1256 = vunpack.c.l.b16 %v737
    %v1257 = vunpack.c.l.b16 %v738
    %v1258 = vunpack.c.l.b16 %v739
    %v1259 = vunpack.c.l.b16 %v740
    %v1260 = vunpack.c.l.b16 %v741
    %v1261 = vunpack.c.l.b16 %v742
    %v1262 = vunpack.c.l.b16 %v743
    %v1263 = vunpack.c.l.b16 %v744
    %v1264 = vunpack.c.l.b16 %v745
    %v1265 = vunpack.c.l.b16 %v746
    %v1266 = vunpack.c.l.b16 %v747
    %v1267 = vunpack.c.l.b16 %v748
    %v1268 = vunpack.c.l.b16 %v749
    %v1269 = vunpack.c.l.b16 %v750
    %v1270 = vunpack.c.l.b16 %v751
    %v1271 = vunpack.c.l.b16 %v752
    %v1272 = vunpack.c.l.b16 %v753
    %v1273 = vunpack.c.l.b16 %v754
    %v1274 = vunpack.c.l.b16 %v755
    %v1275 = vunpack.c.l.b16 %v756
    %v1276 = vunpack.c.l.b16 %v757
    %v1277 = vunpack.c.l.b16 %v758
    %v1278 = vunpack.c.l.b16 %v759
    %v1279 = vunpack.c.l.b16 %v760
    %v1280 = vunpack.c.l.b16 %v761
    %v1281 = vunpack.c.l.b16 %v762
    %v1282 = vunpack.c.l.b16 %v763
    %v1283 = vunpack.c.l.b16 %v764
    %v1284 = vunpack.c.l.b16 %v765
    %v1285 = vunpack.c.l.b16 %v766
    %v1286 = vunpack.c.l.b16 %v767
    %v1287 = vunpack.c.l.b16 %v768
    %v1288 = vunpack.c.l.b16 %v769
    %v1289 = vunpack.c.l.b16 %v770
    %v1290 = vunpack.c.l.b16 %v771
    %v1291 = vunpack.c.l.b16 %v772
    %v1292 = vunpack.c.l.b16 %v773
    %v1293 = vunpack.c.l.b16 %v774
    %v1294 = vunpack.c.l.b16 %v775
    %v1295 = vunpack.c.l.b16 %v776
    %v1296 = vunpack.c.l.b16 %v777
    %v1297 = vunpack.c.l.b16 %v778
    %v1298 = vunpack.c.l.b16 %v779
    %v1299 = vunpack.c.l.b16 %v780
    %v1300 = vunpack.c.l.b16 %v781
    %v1301 = vunpack.c.l.b16 %v782
    %v1302 = vunpack.c.l.b16 %v783
    %v1303 = vunpack.c.l.b16 %v784
    %v1304 = vunpack.c.l.b16 %v785
    %v1305 = vunpack.c.l.b16 %v786
    %v1306 = vunpack.c.l.b16 %v787
    %v1307 = vunpack.c.l.b16 %v788
    %v1308 = vunpack.c.l.b16 %v789
    %v1309 = vunpack.c.l.b16 %v790
    %v1310 = vunpack.c.l.b16 %v791
    %v1311 = vunpack.c.l.b16 %v792
    %v1312 = vunpack.c.l.b16 %v793
    %v1313 = vunpack.c.l.b16 %v794
    %v1314 = vunpack.c.l.b16 %v795
    %v1315 = vunpack.c.l.b16 %v796
    %v1316 = vunpack.c.l.b16 %v797
    %v1317 = vunpack.c.l.b16 %v798
    %v1318 = vunpack.c.l.b16 %v799
    %v1319 = vunpack.c.l.b16 %v800
    %v1320 = vunpack.c.l.b16 %v801
    %v1321 = vunpack.c.l.b16 %v802
    %v1322 = vunpack.c.l.b16 %v803
    %v1323 = vunpack.c.l.b16 %v804
    %v1324 = vunpack.c.l.b16 %v805
    %v1325 = vunpack.c.l.b16 %v806
    %v1326 = vunpack.c.l.b16 %v807
    %v1327 = vunpack.c.l.b16 %v808
    %v1328 = vunpack.c.l.b16 %v809
    %v1329 = vunpack.c.l.b16 %v810
    %v1330 = vunpack.c.l.b16 %v811
    %v1331 = vunpack.c.l.b16 %v812
    %v1332 = vunpack.c.l.b16 %v813
    %v1333 = vunpack.c.l.b16 %v814
    %v1334 = vunpack.c.l.b16 %v815
    %v1335 = vunpack.c.l.b16 %v816
    %v1336 = vunpack.c.l.b16 %v817
    %v1337 = vunpack.c.l.b16 %v818
    %v1338 = vunpack.c.l.b16 %v819
    %v1339 = vunpack.c.l.b16 %v820
    %v1340 = vunpack.c.l.b16 %v821
    %v1341 = vunpack.c.l.b16 %v822
    %v1342 = vunpack.c.l.b16 %v823
    %v1343 = vunpack.c.l.b16 %v824
    %v1344 = vunpack.c.l.b16 %v825
    %v1345 = vunpack.c.l.b16 %v826
    %v1346 = vunpack.c.l.b16 %v827
    %v1347 = vunpack.c.l.b16 %v828
    %v1348 = vunpack.c.l.b16 %v829
    %v1349 = vunpack.c.l.b16 %v830
    %v1350 = vunpack.c.l.b16 %v831
    %v1351 = vunpack.c.l.b16 %v832
    %v1352 = vunpack.c.l.b16 %v833
    %v1353 = vunpack.c.l.b16 %v834
    %v1354 = vunpack.c.l.b16 %v835
    %v1355 = vunpack.c.l.b16 %v836
    %v1356 = vunpack.c.l.b16 %v837
    %v1357 = vunpack.c.l.b16 %v838
    %v1358 = vunpack.c.l.b16 %v839
    %v1359 = vunpack.c.l.b16 %v840
    %v1360 = vunpack.c.l.b16 %v841
    %v1361 = vunpack.c.l.b16 %v842
    %v1362 = vunpack.c.l.b16 %v843
    %v1363 = vunpack.c.l.b16 %v844
    %v1364 = vunpack.c.l.b16 %v845
    %v1365 = vunpack.c.l.b16 %v846
    %v1366 = vunpack.c.l.b16 %v847
    %v1367 = vunpack.c.l.b16 %v848
    %v1368 = vunpack.c.l.b16 %v849
    %v1369 = vunpack.c.l.b16 %v850
    %v1370 = vunpack.c.l.b16 %v851
    %v1371 = vunpack.c.l.b16 %v852
    %v1372 = vunpack.c.l.b16 %v853
    %v1373 = vunpack.c.l.b16 %v854
    %v1374 = vunpack.c.l.b16 %v855
    %v1375 = vunpack.c.l.b16 %v856
    %v1376 = vunpack.c.l.b16 %v857
    %v1377 = vunpack.c.l.b16 %v858
    %v1378 = vunpack.c.l.b16 %v859
    %v1379 = vunpack.c.l.b16 %v860
    %v1380 = vunpack.c.l.b16 %v861
    %v1381 = vunpack.c.l.b16 %v862
    %v1382 = vunpack.c.l.b16 %v863
    %v1383 = vunpack.c.l.b16 %v864
    %v1384 = vunpack.c.l.b16 %v865
    %v1385 = vunpack.c.l.b16 %v866
    %v1386 = vunpack.c.l.b16 %v867
    %v1387 = vunpack.c.l.b16 %v868
    %v1388 = vunpack.c.l.b16 %v869
    %v1389 = vunpack.c.l.b16 %v870
    %v1390 = vunpack.c.l.b16 %v871
    %v1391 = vunpack.c.l.b16 %v872
    %v1392 = vunpack.c.l.b16 %v873
    %v1393 = vunpack.c.l.b16 %v874
    %v1394 = vunpack.c.l.b16 %v875
    %v1395 = vunpack.c.l.b16 %v876
    %v1396 = vunpack.c.l.b16 %v877
    %v1397 = vunpack.c.l.b16 %v878
    %v1398 = vunpack.c.l.b16 %v879
    %v1399 = vunpack.c.l.b16 %v880
    %v1400 = vunpack.c.l.b16 %v881
    %v1401 = vunpack.c.l.b16 %v882
    %v1402 = vunpack.c.l.b16 %v883
    %v1403 = vunpack.c.l.b16 %v884
    %v1404 = vunpack.c.l.b16 %v885
    %v1405 = vunpack.c.l.b16 %v886
    %v1406 = vunpack.c.l.b16 %v887
    %v1407 = vunpack.c.l.b16 %v888
    %v1408 = vunpack.c.l.b16 %v889
    %v1409 = vunpack.c.l.b16 %v890
    %v1410 = vunpack.c.l.b16 %v891
    %v1411 = vunpack.c.l.b16 %v892
    %v1412 = vunpack.c.l.b16 %v893
    %v1413 = vunpack.c.l.b16 %v894
    %v1414 = vunpack.c.l.b16 %v895
    %v1415 = vunpack.c.l.b16 %v896
    %v1416 = vunpack.c.l.b16 %v897
    %v1417 = vunpack.c.l.b16 %v898
    %v1418 = vunpack.c.l.b16 %v899
    %v1419 = vunpack.c.l.b16 %v900
    %v1420 = vunpack.c.l.b16 %v901
    %v1421 = vunpack.c.l.b16 %v902
    %v1422 = vunpack.c.l.b16 %v903
    %v1423 = vunpack.c.l.b16 %v904
    %v1424 = vunpack.c.l.b16 %v905
    %v1425 = vunpack.c.l.b16 %v906
    %v1426 = vunpack.c.l.b16 %v907
    %v1427 = vunpack.c.l.b16 %v908
    %v1428 = vunpack.c.l.b16 %v909
    %v1429 = vunpack.c.l.b16 %v910
    %v1430 = vunpack.c.l.b16 %v911
    %v1431 = vunpack.c.l.b16 %v912
    %v1432 = vunpack.c.l.b16 %v913
    %v1433 = vunpack.c.l.b16 %v914
    %v1434 = vunpack.c.l.b16 %v915
    %v1435 = vunpack.c.l.b16 %v916
    %v1436 = vunpack.c.l.b16 %v917
    %v1437 = vunpack.c.l.b16 %v918
    %v1438 = vunpack.c.l.b16 %v919
    %v1439 = vunpack.c.l.b16 %v920
    %v1440 = vunpack.c.l.b16 %v921
    %v1441 = vunpack.c.l.b16 %v922
    %v1442 = vunpack.c.l.b16 %v923
    %v1443 = vunpack.c.l.b16 %v924
    %v1444 = vunpack.c.l.b16 %v925
    %v1445 = vunpack.c.l.b16 %v926
    %v1446 = vunpack.c.l.b16 %v927
    %v1447 = vunpack.c.l.b16 %v928
    %v1448 = vunpack.c.l.b16 %v929
    %v1449 = vunpack.c.l.b16 %v930
    %v1450 = vunpack.c.l.b16 %v931
    %v1451 = vunpack.c.l.b16 %v932
    %v1452 = vunpack.c.l.b16 %v933
    %v1453 = vunpack.c.l.b16 %v934
    %v1454 = vunpack.c.l.b16 %v935
    %v1455 = vpack.c.b16 %v1200, %v1199
    %v1456 = vpack.c.b16 %v1202, %v1201
    %v1457 = vpack.c.b16 %v1204, %v1203
    %v1458 = vpack.c.b16 %v1206, %v1205
    %v1459 = vpack.c.b16 %v1208, %v1207
    %v1460 = vpack.c.b16 %v1210, %v1209
    %v1461 = vpack.c.b16 %v1212, %v1211
    %v1462 = vpack.c.b16 %v1214, %v1213
    %v1463 = vpack.c.b16 %v1216, %v1215
    %v1464 = vpack.c.b16 %v1218, %v1217
    %v1465 = vpack.c.b16 %v1220, %v1219
    %v1466 = vpack.c.b16 %v1222, %v1221
    %v1467 = vpack.c.b16 %v1224, %v1223
    %v1468 = vpack.c.b16 %v1226, %v1225
    %v1469 = vpack.c.b16 %v1228, %v1227
    %v1470 = vpack.c.b16 %v1230, %v1229
    %v1471 = vpack.c.b16 %v1232, %v1231
    %v1472 = vpack.c.b16 %v1234, %v1233
    %v1473 = vpack.c.b16 %v1236, %v1235
    %v1474 = vpack.c.b16 %v1238, %v1237
    %v1475 = vpack.c.b16 %v1240, %v1239
    %v1476 = vpack.c.b16 %v1242, %v1241
    %v1477 = vpack.c.b16 %v1244, %v1243
    %v1478 = vpack.c.b16 %v1246, %v1245
    %v1479 = vpack.c.b16 %v1248, %v1247
    %v1480 = vpack.c.b16 %v1250, %v1249
    %v1481 = vpack.c.b16 %v1252, %v1251
    %v1482 = vpack.c.b16 %v1254, %v1253
    %v1483 = vpack.c.b16 %v1256, %v1255
    %v1484 = vpack.c.b16 %v1258, %v1257
    %v1485 = vpack.c.b16 %v1260, %v1259
    %v1486 = vpack.c.b16 %v1262, %v1261
    %v1487 = vpack.c.b16 %v1264, %v1263
    %v1488 = vpack.c.b16 %v1266, %v1265
    %v1489 = vpack.c.b16 %v1268, %v1267
    %v1490 = vpack.c.b16 %v1270, %v1269
    %v1491 = vpack.c.b16 %v1272, %v1271
    %v1492 = vpack.c.b16 %v1274, %v1273
    %v1493 = vpack.c.b16 %v1276, %v1275
    %v1494 = vpack.c.b16 %v1278, %v1277
    %v1495 = vpack.c.b16 %v1280, %v1279
    %v1496 = vpack.c.b16 %v1282, %v1281
    %v1497 = vpack.c.b16 %v1284, %v1283
    %v1498 = vpack.c.b16 %v1286, %v1285
    %v1499 = vpack.c.b16 %v1288, %v1287
    %v1500 = vpack.c.b16 %v1290, %v1289
    %v1501 = vpack.c.b16 %v1292, %v1291
    %v1502 = vpack.c.b16 %v1294, %v1293
    %v1503 = vpack.c.b16 %v1296, %v1295
    %v1504 = vpack.c.b16 %v1298, %v1297
    %v1505 = vpack.c.b16 %v1300, %v1299
    %v1506 = vpack.c.b16 %v1302, %v1301
    %v1507 = vpack.c.b16 %v1304, %v1303
    %v1508 = vpack.c.b16 %v1306, %v1305
    %v1509 = vpack.c.b16 %v1308, %v1307
    %v1510 = vpack.c.b16 %v1310, %v1309
    %v1511 = vpack.c.b16 %v1312, %v1311
    %v1512 = vpack.c.b16 %v1314, %v1313
    %v1513 = vpack.c.b16 %v1316, %v1315
    %v1514 = vpack.c.b16 %v1318, %v1317
    %v1515 = vpack.c.b16 %v1320, %v1319
    %v1516 = vpack.c.b16 %v1322, %v1321
    %v1517 = vpack.c.b16 %v1324, %v1323
    %v1518 = vpack.c.b16 %v1326, %v1325
    %v1519 = vpack.c.b16 %v1328, %v1327
    %v1520 = vpack.c.b16 %v1330, %v1329
    %v1521 = vpack.c.b16 %v1332, %v1331
    %v1522 = vpack.c.b16 %v1334, %v1333
    %v1523 = vpack.c.b16 %v1336, %v1335
    %v1524 = vpack.c.b16 %v1338, %v1337
    %v1525 = vpack.c.b16 %v1340, %v1339
    %v1526 = vpack.c.b16 %v1342, %v1341
    %v1527 = vpack.c.b16 %v1344, %v1343
    %v1528 = vpack.c.b16 %v1346, %v1345
    %v1529 = vpack.c.b16 %v1348, %v1347
    %v1530 = vpack.c.b16 %v1350, %v1349
    %v1531 = vpack.c.b16 %v1352, %v1351
    %v1532 = vpack.c.b16 %v1354, %v1353
    %v1533 = vpack.c.b16 %v1356, %v1355
    %v1534 = vpack.c.b16 %v1358, %v1357
    %v1535 = vpack.c.b16 %v1360, %v1359
    %v1536 = vpack.c.b16 %v1362, %v1361
    %v1537 = vpack.c.b16 %v1364, %v1363
    %v1538 = vpack.c.b16 %v1366, %v1365
    %v1539 = vpack.c.b16 %v1368, %v1367
    %v1540 = vpack.c.b16 %v1370, %v1369
    %v1541 = vpack.c.b16 %v1372, %v1371
    %v1542 = vpack.c.b16 %v1374, %v1373
    %v1543 = vpack.c.b16 %v1376, %v1375
    %v1544 = vpack.c.b16 %v1378, %v1377
    %v1545 = vpack.c.b16 %v1380, %v1379
    %v1546 = vpack.c.b16 %v1382, %v1381
    %v1547 = vpack.c.b16 %v1384, %v1383
    %v1548 = vpack.c.b16 %v1386, %v1385
    %v1549 = vpack.c.b16 %v1388, %v1387
    %v1550 = vpack.c.b16 %v1390, %v1389
    %v1551 = vpack.c.b16 %v1392, %v1391
    %v1552 = vpack.c.b16 %v1394, %v1393
    %v1553 = vpack.c.b16 %v1396, %v1395
    %v1554 = vpack.c.b16 %v1398, %v1397
    %v1555 = vpack.c.b16 %v1400, %v1399
    %v1556 = vpack.c.b16 %v1402, %v1401
    %v1557 = vpack.c.b16 %v1404, %v1403
    %v1558 = vpack.c.b16 %v1406, %v1405
    %v1559 = vpack.c.b16 %v1408, %v1407
    %v1560 = vpack.c.b16 %v1410, %v1409
    %v1561 = vpack.c.b16 %v1412, %v1411
    %v1562 = vpack.c.b16 %v1414, %v1413
    %v1563 = vpack.c.b16 %v1416, %v1415
    %v1564 = vpack.c.b16 %v1418, %v1417
    %v1565 = vpack.c.b16 %v1420, %v1419
    %v1566 = vpack.c.b16 %v1422, %v1421
    %v1567 = vpack.c.b16 %v1424, %v1423
    %v1568 = vpack.c.b16 %v1426, %v1425
    %v1569 = vpack.c.b16 %v1428, %v1427
    %v1570 = vpack.c.b16 %v1430, %v1429
    %v1571 = vpack.c.b16 %v1432, %v1431
    %v1572 = vpack.c.b16 %v1434, %v1433
    %v1573 = vpack.c.b16 %v1436, %v1435
    %v1574 = vpack.c.b16 %v1438, %v1437
    %v1575 = vpack.c.b16 %v1440, %v1439
    %v1576 = vpack.c.b16 %v1442, %v1441
    %v1577 = vpack.c.b16 %v1444, %v1443
    %v1578 = vpack.c.b16 %v1446, %v1445
    %v1579 = vpack.c.b16 %v1448, %v1447
    %v1580 = vpack.c.b16 %v1450, %v1449
    %v1581 = vpack.c.b16 %v1452, %v1451
    %v1582 = vpack.c.b16 %v1454, %v1453
    %1711 = vmatprep.subr.bf16.mxu0 0
    %1712 = vmatpush1.bf16.msra.mxu0 %v1455
    %1713 = vmatprep.subr.bf16.mxu0 0
    %1714 = vmatpush1.bf16.msra.mxu0 %v1456
    %1715 = vmatprep.subr.bf16.mxu0 0
    %1716 = vmatpush1.bf16.msra.mxu0 %v1457
    %1717 = vmatprep.subr.bf16.mxu0 0
    %1718 = vmatpush1.bf16.msra.mxu0 %v1458
    %1719 = vmatprep.subr.bf16.mxu0 0
    %1720 = vmatpush1.bf16.msra.mxu0 %v1459
    %1721 = vmatprep.subr.bf16.mxu0 0
    %1722 = vmatpush1.bf16.msra.mxu0 %v1460
    %1723 = vmatprep.subr.bf16.mxu0 0
    %1724 = vmatpush1.bf16.msra.mxu0 %v1461
    %1725 = vmatprep.subr.bf16.mxu0 0
    %1726 = vmatpush1.bf16.msra.mxu0 %v1462
    %1727 = vmatprep.subr.bf16.mxu0 0
    %1728 = vmatpush1.bf16.msra.mxu0 %v1463
    %1729 = vmatprep.subr.bf16.mxu0 0
    %1730 = vmatpush1.bf16.msra.mxu0 %v1464
    %1731 = vmatprep.subr.bf16.mxu0 0
    %1732 = vmatpush1.bf16.msra.mxu0 %v1465
    %1733 = vmatprep.subr.bf16.mxu0 0
    %1734 = vmatpush1.bf16.msra.mxu0 %v1466
    %1735 = vmatprep.subr.bf16.mxu0 0
    %1736 = vmatpush1.bf16.msra.mxu0 %v1467
    %1737 = vmatprep.subr.bf16.mxu0 0
    %1738 = vmatpush1.bf16.msra.mxu0 %v1468
    %1739 = vmatprep.subr.bf16.mxu0 0
    %1740 = vmatpush1.bf16.msra.mxu0 %v1469
    %1741 = vmatprep.subr.bf16.mxu0 0
    %1742 = vmatpush1.bf16.msra.mxu0 %v1470
    %1743 = vmatprep.mubr.bf16.mxu0 %v665
    %1744 = vmatmul.mubr.bf16.gmra.mrb[0].mxu0 %v664
    %v1745 = vpop.f32.mrb[0].mxu0
    %v1746 = vadd.f32 %v941, %v1745
    %v1747 = vpop.f32.mrb[0].mxu0
    %v1748 = vpop.f32.mrb[0].mxu0
    %v1749 = vpop.f32.mrb[0].mxu0
    %1750 = vdwg.mxu0
    %1751 = vmatprep.subr.bf16.mxu0 0
    %1752 = vmatpush1.bf16.msra.mxu0 %v1471
    %1753 = vmatprep.subr.bf16.mxu0 0
    %1754 = vmatpush1.bf16.msra.mxu0 %v1472
    %1755 = vmatprep.subr.bf16.mxu0 0
    %1756 = vmatpush1.bf16.msra.mxu0 %v1473
    %1757 = vmatprep.subr.bf16.mxu0 0
    %1758 = vmatpush1.bf16.msra.mxu0 %v1474
    %1759 = vmatprep.subr.bf16.mxu0 0
    %1760 = vmatpush1.bf16.msra.mxu0 %v1475
    %1761 = vmatprep.subr.bf16.mxu0 0
    %1762 = vmatpush1.bf16.msra.mxu0 %v1476
    %1763 = vmatprep.subr.bf16.mxu0 0
    %1764 = vmatpush1.bf16.msra.mxu0 %v1477
    %1765 = vmatprep.subr.bf16.mxu0 0
    %1766 = vmatpush1.bf16.msra.mxu0 %v1478
    %1767 = vmatprep.subr.bf16.mxu0 0
    %1768 = vmatpush1.bf16.msra.mxu0 %v1479
    %1769 = vmatprep.subr.bf16.mxu0 0
    %1770 = vmatpush1.bf16.msra.mxu0 %v1480
    %1771 = vmatprep.subr.bf16.mxu0 0
    %1772 = vmatpush1.bf16.msra.mxu0 %v1481
    %1773 = vmatprep.subr.bf16.mxu0 0
    %1774 = vmatpush1.bf16.msra.mxu0 %v1482
    %1775 = vmatprep.subr.bf16.mxu0 0
    %1776 = vmatpush1.bf16.msra.mxu0 %v1483
    %1777 = vmatprep.subr.bf16.mxu0 0
    %1778 = vmatpush1.bf16.msra.mxu0 %v1484
    %1779 = vmatprep.subr.bf16.mxu0 0
    %1780 = vmatpush1.bf16.msra.mxu0 %v1485
    %1781 = vmatprep.subr.bf16.mxu0 0
    %1782 = vmatpush1.bf16.msra.mxu0 %v1486
    %1783 = vmatprep.mubr.bf16.mxu0 %v667
    %1784 = vmatmul.mubr.bf16.gmra.mrb[0].mxu0 %v666
    %v1785 = vpop.f32.mrb[0].mxu0
    %v1786 = vadd.f32 %v1746, %v1785
    %v1787 = vpop.f32.mrb[0].mxu0
    %v1788 = vpop.f32.mrb[0].mxu0
    %v1789 = vpop.f32.mrb[0].mxu0
    %1790 = vdwg.mxu0
    %1791 = vmatprep.subr.bf16.mxu0 0
    %1792 = vmatpush1.bf16.msra.mxu0 %v1487
    %1793 = vmatprep.subr.bf16.mxu0 0
    %1794 = vmatpush1.bf16.msra.mxu0 %v1488
    %1795 = vmatprep.subr.bf16.mxu0 0
    %1796 = vmatpush1.bf16.msra.mxu0 %v1489
    %1797 = vmatprep.subr.bf16.mxu0 0
    %1798 = vmatpush1.bf16.msra.mxu0 %v1490
    %1799 = vmatprep.subr.bf16.mxu0 0
    %1800 = vmatpush1.bf16.msra.mxu0 %v1491
    %1801 = vmatprep.subr.bf16.mxu0 0
    %1802 = vmatpush1.bf16.msra.mxu0 %v1492
    %1803 = vmatprep.subr.bf16.mxu0 0
    %1804 = vmatpush1.bf16.msra.mxu0 %v1493
    %1805 = vmatprep.subr.bf16.mxu0 0
    %1806 = vmatpush1.bf16.msra.mxu0 %v1494
    %1807 = vmatprep.subr.bf16.mxu0 0
    %1808 = vmatpush1.bf16.msra.mxu0 %v1495
    %1809 = vmatprep.subr.bf16.mxu0 0
    %1810 = vmatpush1.bf16.msra.mxu0 %v1496
    %1811 = vmatprep.subr.bf16.mxu0 0
    %1812 = vmatpush1.bf16.msra.mxu0 %v1497
    %1813 = vmatprep.subr.bf16.mxu0 0
    %1814 = vmatpush1.bf16.msra.mxu0 %v1498
    %1815 = vmatprep.subr.bf16.mxu0 0
    %1816 = vmatpush1.bf16.msra.mxu0 %v1499
    %1817 = vmatprep.subr.bf16.mxu0 0
    %1818 = vmatpush1.bf16.msra.mxu0 %v1500
    %1819 = vmatprep.subr.bf16.mxu0 0
    %1820 = vmatpush1.bf16.msra.mxu0 %v1501
    %1821 = vmatprep.subr.bf16.mxu0 0
    %1822 = vmatpush1.bf16.msra.mxu0 %v1502
    %1823 = vmatprep.mubr.bf16.mxu0 %v669
    %1824 = vmatmul.mubr.bf16.gmra.mrb[0].mxu0 %v668
    %v1825 = vpop.f32.mrb[0].mxu0
    %v1826 = vadd.f32 %v1786, %v1825
    %v1827 = vpop.f32.mrb[0].mxu0
    %v1828 = vpop.f32.mrb[0].mxu0
    %v1829 = vpop.f32.mrb[0].mxu0
    %1830 = vdwg.mxu0
    %1831 = vmatprep.subr.bf16.mxu0 0
    %1832 = vmatpush1.bf16.msra.mxu0 %v1503
    %1833 = vmatprep.subr.bf16.mxu0 0
    %1834 = vmatpush1.bf16.msra.mxu0 %v1504
    %1835 = vmatprep.subr.bf16.mxu0 0
    %1836 = vmatpush1.bf16.msra.mxu0 %v1505
    %1837 = vmatprep.subr.bf16.mxu0 0
    %1838 = vmatpush1.bf16.msra.mxu0 %v1506
    %1839 = vmatprep.subr.bf16.mxu0 0
    %1840 = vmatpush1.bf16.msra.mxu0 %v1507
    %1841 = vmatprep.subr.bf16.mxu0 0
    %1842 = vmatpush1.bf16.msra.mxu0 %v1508
    %1843 = vmatprep.subr.bf16.mxu0 0
    %1844 = vmatpush1.bf16.msra.mxu0 %v1509
    %1845 = vmatprep.subr.bf16.mxu0 0
    %1846 = vmatpush1.bf16.msra.mxu0 %v1510
    %1847 = vmatprep.subr.bf16.mxu0 0
    %1848 = vmatpush1.bf16.msra.mxu0 %v1511
    %1849 = vmatprep.subr.bf16.mxu0 0
    %1850 = vmatpush1.bf16.msra.mxu0 %v1512
    %1851 = vmatprep.subr.bf16.mxu0 0
    %1852 = vmatpush1.bf16.msra.mxu0 %v1513
    %1853 = vmatprep.subr.bf16.mxu0 0
    %1854 = vmatpush1.bf16.msra.mxu0 %v1514
    %1855 = vmatprep.subr.bf16.mxu0 0
    %1856 = vmatpush1.bf16.msra.mxu0 %v1515
    %1857 = vmatprep.subr.bf16.mxu0 0
    %1858 = vmatpush1.bf16.msra.mxu0 %v1516
    %1859 = vmatprep.subr.bf16.mxu0 0
    %1860 = vmatpush1.bf16.msra.mxu0 %v1517
    %1861 = vmatprep.subr.bf16.mxu0 0
    %1862 = vmatpush1.bf16.msra.mxu0 %v1518
    %1863 = vmatprep.mubr.bf16.mxu0 %v671
    %1864 = vmatmul.mubr.bf16.gmra.mrb[0].mxu0 %v670
    %v1865 = vpop.f32.mrb[0].mxu0
    %v1866 = vadd.f32 %v1826, %v1865
    %v1867 = vpop.f32.mrb[0].mxu0
    %v1868 = vpop.f32.mrb[0].mxu0
    %v1869 = vpop.f32.mrb[0].mxu0
    %1870 = vdwg.mxu0
    %1871 = vmatprep.subr.bf16.mxu0 0
    %1872 = vmatpush1.bf16.msra.mxu0 %v1519
    %1873 = vmatprep.subr.bf16.mxu0 0
    %1874 = vmatpush1.bf16.msra.mxu0 %v1520
    %1875 = vmatprep.subr.bf16.mxu0 0
    %1876 = vmatpush1.bf16.msra.mxu0 %v1521
    %1877 = vmatprep.subr.bf16.mxu0 0
    %1878 = vmatpush1.bf16.msra.mxu0 %v1522
    %1879 = vmatprep.subr.bf16.mxu0 0
    %1880 = vmatpush1.bf16.msra.mxu0 %v1523
    %1881 = vmatprep.subr.bf16.mxu0 0
    %1882 = vmatpush1.bf16.msra.mxu0 %v1524
    %1883 = vmatprep.subr.bf16.mxu0 0
    %1884 = vmatpush1.bf16.msra.mxu0 %v1525
    %1885 = vmatprep.subr.bf16.mxu0 0
    %1886 = vmatpush1.bf16.msra.mxu0 %v1526
    %1887 = vmatprep.subr.bf16.mxu0 0
    %1888 = vmatpush1.bf16.msra.mxu0 %v1527
    %1889 = vmatprep.subr.bf16.mxu0 0
    %1890 = vmatpush1.bf16.msra.mxu0 %v1528
    %1891 = vmatprep.subr.bf16.mxu0 0
    %1892 = vmatpush1.bf16.msra.mxu0 %v1529
    %1893 = vmatprep.subr.bf16.mxu0 0
    %1894 = vmatpush1.bf16.msra.mxu0 %v1530
    %1895 = vmatprep.subr.bf16.mxu0 0
    %1896 = vmatpush1.bf16.msra.mxu0 %v1531
    %1897 = vmatprep.subr.bf16.mxu0 0
    %1898 = vmatpush1.bf16.msra.mxu0 %v1532
    %1899 = vmatprep.subr.bf16.mxu0 0
    %1900 = vmatpush1.bf16.msra.mxu0 %v1533
    %1901 = vmatprep.subr.bf16.mxu0 0
    %1902 = vmatpush1.bf16.msra.mxu0 %v1534
    %1903 = vmatprep.mubr.bf16.mxu0 %v673
    %1904 = vmatmul.mubr.bf16.gmra.mrb[0].mxu0 %v672
    %v1905 = vpop.f32.mrb[0].mxu0
    %v1906 = vadd.f32 %v1866, %v1905
    %v1907 = vpop.f32.mrb[0].mxu0
    %v1908 = vpop.f32.mrb[0].mxu0
    %v1909 = vpop.f32.mrb[0].mxu0
    %1910 = vdwg.mxu0
    %1911 = vmatprep.subr.bf16.mxu0 0
    %1912 = vmatpush1.bf16.msra.mxu0 %v1535
    %1913 = vmatprep.subr.bf16.mxu0 0
    %1914 = vmatpush1.bf16.msra.mxu0 %v1536
    %1915 = vmatprep.subr.bf16.mxu0 0
    %1916 = vmatpush1.bf16.msra.mxu0 %v1537
    %1917 = vmatprep.subr.bf16.mxu0 0
    %1918 = vmatpush1.bf16.msra.mxu0 %v1538
    %1919 = vmatprep.subr.bf16.mxu0 0
    %1920 = vmatpush1.bf16.msra.mxu0 %v1539
    %1921 = vmatprep.subr.bf16.mxu0 0
    %1922 = vmatpush1.bf16.msra.mxu0 %v1540
    %1923 = vmatprep.subr.bf16.mxu0 0
    %1924 = vmatpush1.bf16.msra.mxu0 %v1541
    %1925 = vmatprep.subr.bf16.mxu0 0
    %1926 = vmatpush1.bf16.msra.mxu0 %v1542
    %1927 = vmatprep.subr.bf16.mxu0 0
    %1928 = vmatpush1.bf16.msra.mxu0 %v1543
    %1929 = vmatprep.subr.bf16.mxu0 0
    %1930 = vmatpush1.bf16.msra.mxu0 %v1544
    %1931 = vmatprep.subr.bf16.mxu0 0
    %1932 = vmatpush1.bf16.msra.mxu0 %v1545
    %1933 = vmatprep.subr.bf16.mxu0 0
    %1934 = vmatpush1.bf16.msra.mxu0 %v1546
    %1935 = vmatprep.subr.bf16.mxu0 0
    %1936 = vmatpush1.bf16.msra.mxu0 %v1547
    %1937 = vmatprep.subr.bf16.mxu0 0
    %1938 = vmatpush1.bf16.msra.mxu0 %v1548
    %1939 = vmatprep.subr.bf16.mxu0 0
    %1940 = vmatpush1.bf16.msra.mxu0 %v1549
    %1941 = vmatprep.subr.bf16.mxu0 0
    %1942 = vmatpush1.bf16.msra.mxu0 %v1550
    %1943 = vmatprep.mubr.bf16.mxu0 %v675
    %1944 = vmatmul.mubr.bf16.gmra.mrb[0].mxu0 %v674
    %v1945 = vpop.f32.mrb[0].mxu0
    %v1946 = vadd.f32 %v1906, %v1945
    %v1947 = vpop.f32.mrb[0].mxu0
    %v1948 = vpop.f32.mrb[0].mxu0
    %v1949 = vpop.f32.mrb[0].mxu0
    %1950 = vdwg.mxu0
    %1951 = vmatprep.subr.bf16.mxu0 0
    %1952 = vmatpush1.bf16.msra.mxu0 %v1551
    %1953 = vmatprep.subr.bf16.mxu0 0
    %1954 = vmatpush1.bf16.msra.mxu0 %v1552
    %1955 = vmatprep.subr.bf16.mxu0 0
    %1956 = vmatpush1.bf16.msra.mxu0 %v1553
    %1957 = vmatprep.subr.bf16.mxu0 0
    %1958 = vmatpush1.bf16.msra.mxu0 %v1554
    %1959 = vmatprep.subr.bf16.mxu0 0
    %1960 = vmatpush1.bf16.msra.mxu0 %v1555
    %1961 = vmatprep.subr.bf16.mxu0 0
    %1962 = vmatpush1.bf16.msra.mxu0 %v1556
    %1963 = vmatprep.subr.bf16.mxu0 0
    %1964 = vmatpush1.bf16.msra.mxu0 %v1557
    %1965 = vmatprep.subr.bf16.mxu0 0
    %1966 = vmatpush1.bf16.msra.mxu0 %v1558
    %1967 = vmatprep.subr.bf16.mxu0 0
    %1968 = vmatpush1.bf16.msra.mxu0 %v1559
    %1969 = vmatprep.subr.bf16.mxu0 0
    %1970 = vmatpush1.bf16.msra.mxu0 %v1560
    %1971 = vmatprep.subr.bf16.mxu0 0
    %1972 = vmatpush1.bf16.msra.mxu0 %v1561
    %1973 = vmatprep.subr.bf16.mxu0 0
    %1974 = vmatpush1.bf16.msra.mxu0 %v1562
    %1975 = vmatprep.subr.bf16.mxu0 0
    %1976 = vmatpush1.bf16.msra.mxu0 %v1563
    %1977 = vmatprep.subr.bf16.mxu0 0
    %1978 = vmatpush1.bf16.msra.mxu0 %v1564
    %1979 = vmatprep.subr.bf16.mxu0 0
    %1980 = vmatpush1.bf16.msra.mxu0 %v1565
    %1981 = vmatprep.subr.bf16.mxu0 0
    %1982 = vmatpush1.bf16.msra.mxu0 %v1566
    %1983 = vmatprep.mubr.bf16.mxu0 %v677
    %1984 = vmatmul.mubr.bf16.gmra.mrb[0].mxu0 %v676
    %v1985 = vpop.f32.mrb[0].mxu0
    %v1986 = vadd.f32 %v1946, %v1985
    %v1987 = vpop.f32.mrb[0].mxu0
    %v1988 = vpop.f32.mrb[0].mxu0
    %v1989 = vpop.f32.mrb[0].mxu0
    %1990 = vdwg.mxu0
    %1991 = vmatprep.subr.bf16.mxu0 0
    %1992 = vmatpush1.bf16.msra.mxu0 %v1567
    %1993 = vmatprep.subr.bf16.mxu0 0
    %1994 = vmatpush1.bf16.msra.mxu0 %v1568
    %1995 = vmatprep.subr.bf16.mxu0 0
    %1996 = vmatpush1.bf16.msra.mxu0 %v1569
    %1997 = vmatprep.subr.bf16.mxu0 0
    %1998 = vmatpush1.bf16.msra.mxu0 %v1570
    %1999 = vmatprep.subr.bf16.mxu0 0
    %2000 = vmatpush1.bf16.msra.mxu0 %v1571
    %2001 = vmatprep.subr.bf16.mxu0 0
    %2002 = vmatpush1.bf16.msra.mxu0 %v1572
    %2003 = vmatprep.subr.bf16.mxu0 0
    %2004 = vmatpush1.bf16.msra.mxu0 %v1573
    %2005 = vmatprep.subr.bf16.mxu0 0
    %2006 = vmatpush1.bf16.msra.mxu0 %v1574
    %2007 = vmatprep.subr.bf16.mxu0 0
    %2008 = vmatpush1.bf16.msra.mxu0 %v1575
    %2009 = vmatprep.subr.bf16.mxu0 0
    %2010 = vmatpush1.bf16.msra.mxu0 %v1576
    %2011 = vmatprep.subr.bf16.mxu0 0
    %2012 = vmatpush1.bf16.msra.mxu0 %v1577
    %2013 = vmatprep.subr.bf16.mxu0 0
    %2014 = vmatpush1.bf16.msra.mxu0 %v1578
    %2015 = vmatprep.subr.bf16.mxu0 0
    %2016 = vmatpush1.bf16.msra.mxu0 %v1579
    %2017 = vmatprep.subr.bf16.mxu0 0
    %2018 = vmatpush1.bf16.msra.mxu0 %v1580
    %2019 = vmatprep.subr.bf16.mxu0 0
    %2020 = vmatpush1.bf16.msra.mxu0 %v1581
    %2021 = vmatprep.subr.bf16.mxu0 0
    %2022 = vmatpush1.bf16.msra.mxu0 %v1582
    %2023 = vmatprep.mubr.bf16.mxu0 %v679
    %2024 = vmatmul.mubr.bf16.gmra.mrb[0].mxu0 %v678
    %v2025 = vpop.f32.mrb[0].mxu0
    %v2026 = vadd.f32 %v1986, %v2025
    %v2027 = vpop.f32.mrb[0].mxu0
    %v2028 = vpop.f32.mrb[0].mxu0
    %v2029 = vpop.f32.mrb[0].mxu0
    %2030 = vdwg.mxu0
    %vm2031 = vcmask 58368
    %2032 = vst.msk [vmem:[#allocation2] sm:$0x3] %vm2031, %v2026
    // Predicated region
    $region22: #{classifier_forward.1} parent=1 // pred_check
      _
    $region23: #{classifier_forward.1} parent=1 // pred_check_branch
      %2034 = sbr.rel (0) target = $region25
    $region24: #{classifier_forward.1} parent=1 // pred_region
      %s2036 = ssub.s32 32, 32
      %2037 = vsyncadd [#allocation3], %s2036
      %s2039 = sshll.u32 [#allocation2], 4
      %s2040 = int_to_ptr.vmem [resolvable:$true] %s2039
      %2042 = dma.vmem_to_hbm [thread:$0]  %s2040, 32, %s5, [#allocation3]
    $region25: #{classifier_forward.1} parent=1 // pred_fallthru
      _
    // Predicated region
    $region26: #{classifier_forward.1} parent=1 // pred_check
      _
    $region27: #{classifier_forward.1} parent=1 // pred_check_branch
      %2044 = sbr.rel (0) target = $region29
    $region28: #{classifier_forward.1} parent=1 // pred_region
      %2045 = dma.done [#allocation3], 32
    $region29: #{classifier_forward.1} parent=1 // pred_fallthru
      _
    %2046 = vsyncpa [#allocation3], 1

</llo_original>
